<compile_context>
chip_gen: v5e
topology: v5e:2x2
jax: 0.10.0
libtpu: 0.0.40
codegen_flags: <defaults>
</compile_context>

<pallas_src>
import functools

import jax
import jax.numpy as jnp
from jax import lax
from jax.experimental import pallas as pl
from jax.experimental.pallas import tpu as pltpu


def _matmul_bias_sigmoid_kernel(p_ref, w_ref, b_ref, o_ref):
    """y = sigmoid(P @ W + b), one MXU call, lane-dense output.

    p_ref: (tm, K*K*Cin)   im2col patch rows
    w_ref: (K*K*Cin, Cp)   flattened weights, Cout zero-padded to Cp (mult of 128)
    b_ref: (1, Cp)         bias (zero-padded)
    o_ref: (tm, Cp)        output rows (lane-dense, unmasked stores)
    """
    acc = jnp.dot(p_ref[...], w_ref[...], preferred_element_type=jnp.float32)
    o_ref[...] = jax.nn.sigmoid(acc + b_ref[...]).astype(o_ref.dtype)


def dae_forward(x_nchw, w_hwio, bias, *, stride, padding):
    """Equivalent of DAE.forward in eval mode: sigmoid(Conv2d(x)).

    x_nchw: (N, Cin, H, W) float32  (PyTorch NCHW)
    w_hwio: (K, K, Cin, Cout) float32
    bias:   (Cout,) float32
    returns: (N, Cout, H_out, W_out) float32 (NCHW, matching PyTorch output)
    """
    N, Cin, H, W = x_nchw.shape
    K = w_hwio.shape[0]
    Cout = w_hwio.shape[-1]

    # ---- layout glue in plain XLA: NHWC, zero pad, im2col -----------------
    x = jnp.transpose(x_nchw, (0, 2, 3, 1))  # NHWC
    x_pad = jnp.pad(x, ((0, 0), (padding, padding), (padding, padding), (0, 0)))
    Hp, Wp = H + 2 * padding, W + 2 * padding
    H_out = (Hp - K) // stride + 1
    W_out = (Wp - K) // stride + 1

    taps = []
    for kh in range(K):
        for kw in range(K):
            taps.append(x_pad[:, kh:kh + stride * (H_out - 1) + 1:stride,
                              kw:kw + stride * (W_out - 1) + 1:stride, :])
    # Channel order (kh, kw, cin) matches w_hwio.reshape(K*K*Cin, Cout).
    patches = jnp.concatenate(taps, axis=-1)            # (N, H_out, W_out, K*K*Cin)

    M = N * H_out * W_out
    KC = K * K * Cin
    patches = patches.reshape(M, KC)

    # Lane-dense weights/bias: pad Cout up to a multiple of 128.
    Cp = ((Cout + 127) // 128) * 128
    w_mat = jnp.pad(w_hwio.reshape(KC, Cout), ((0, 0), (0, Cp - Cout)))
    b_mat = jnp.pad(bias, (0, Cp - Cout)).reshape(1, Cp)

    # Row tiling: one grid step at small sizes; 512-row blocks otherwise.
    M8 = ((M + 7) // 8) * 8
    tm = M8 if M8 <= 512 else 512
    grid_m = (M8 + tm - 1) // tm
    Mpad = grid_m * tm
    if Mpad != M:
        patches = jnp.pad(patches, ((0, Mpad - M), (0, 0)))

    out = pl.pallas_call(
        _matmul_bias_sigmoid_kernel,
        out_shape=jax.ShapeDtypeStruct((Mpad, Cp), x.dtype),
        grid=(grid_m,),
        in_specs=[
            pl.BlockSpec((tm, KC), lambda i: (i, 0)),
            pl.BlockSpec((KC, Cp), lambda i: (0, 0)),
            pl.BlockSpec((1, Cp), lambda i: (0, 0)),
        ],
        out_specs=pl.BlockSpec((tm, Cp), lambda i: (i, 0)),
        compiler_params=pltpu.CompilerParams(
            dimension_semantics=("parallel",)),
    )(patches, w_mat, b_mat)

    # Slice away the Cout / row padding (XLA glue) and restore NCHW.
    y = out[:M, :Cout].reshape(N, H_out, W_out, Cout)
    return jnp.transpose(y, (0, 3, 1, 2))


dae_forward = jax.jit(dae_forward, static_argnames=("stride", "padding"))


def _reference_forward(x_nchw, w_hwio, bias, *, stride, padding):
    """Pure-JAX reference (conv + sigmoid) for correctness checking."""
    x = jnp.transpose(x_nchw, (0, 2, 3, 1))
    y = lax.conv_general_dilated(
        x, w_hwio,
        window_strides=(stride, stride),
        padding=[(padding, padding), (padding, padding)],
        dimension_numbers=('NHWC', 'HWIO', 'NHWC'))
    y = jax.nn.sigmoid(y + bias[None, None, None, :])
    return jnp.transpose(y, (0, 3, 1, 2))


if __name__ == "__main__":
    # layer_config = [kernel_size, input_channels, output_channels, stride, padding]
    kernel_size, in_ch, out_ch, stride, padding = 3, 4, 8, 1, 1
    N, H, W = 2, 16, 16

    key = jax.random.PRNGKey(0)
    kx, kw, kb = jax.random.split(key, 3)

    # Deterministic init mimicking nn.Conv2d default: U(-1/sqrt(fan_in), 1/sqrt(fan_in))
    fan_in = in_ch * kernel_size * kernel_size
    bound = 1.0 / (fan_in ** 0.5)
    w = jax.random.uniform(kw, (kernel_size, kernel_size, in_ch, out_ch),
                           minval=-bound, maxval=bound, dtype=jnp.float32)
    b = jax.random.uniform(kb, (out_ch,), minval=-bound, maxval=bound,
                           dtype=jnp.float32)
    x = jax.random.normal(kx, (N, in_ch, H, W), dtype=jnp.float32)

    y = dae_forward(x, w, b, stride=stride, padding=padding)
    y = jax.block_until_ready(y)

    y_ref = _reference_forward(x, w, b, stride=stride, padding=padding)
    assert y.shape == (N, out_ch, H, W), y.shape
    assert jnp.allclose(y, y_ref, atol=1e-5, rtol=1e-5), \
        float(jnp.max(jnp.abs(y - y_ref)))

    print("KERNEL_OK")
</pallas_src>

<mosaic_0001>
module attributes {stable_mosaic.version = 11 : i64} {
  func.func @_matmul_bias_sigmoid_kernel(%arg0: i32, %arg1: memref<512x36xf32, #tpu.memory_space<vmem>>, %arg2: memref<36x128xf32, #tpu.memory_space<vmem>>, %arg3: memref<1x128xf32, #tpu.memory_space<vmem>>, %arg4: memref<512x128xf32, #tpu.memory_space<vmem>>) attributes {dimension_semantics = [#tpu.dimension_semantics<parallel>], iteration_bounds = array<i64: 1>, scalar_prefetch = 0 : i64, scratch_operands = 0 : i64, tpu.core_type = #tpu.core_type<tc>, window_params = [{transform_indices = @transform_0, window_bounds = array<i64: 512, 36>}, {pipeline_mode = #tpu.pipeline_mode<synchronous>, transform_indices = @transform_1, window_bounds = array<i64: 36, 128>}, {pipeline_mode = #tpu.pipeline_mode<synchronous>, transform_indices = @transform_2, window_bounds = array<i64: 1, 128>}, {transform_indices = @transform_3, window_bounds = array<i64: 512, 128>}]} {
    %c0 = arith.constant 0 : index
    %c0_0 = arith.constant 0 : index
    %0 = vector.load %arg1[%c0, %c0_0] : memref<512x36xf32, #tpu.memory_space<vmem>>, vector<512x36xf32>
    %c0_1 = arith.constant 0 : index
    %c0_2 = arith.constant 0 : index
    %1 = vector.load %arg2[%c0_1, %c0_2] : memref<36x128xf32, #tpu.memory_space<vmem>>, vector<36x128xf32>
    %cst = arith.constant dense<0.000000e+00> : vector<512x128xf32>
    %2 = tpu.matmul %0, %1, %cst {dimension_numbers = #tpu.dot_dimension_numbers<[1], [0], [0], [1], [0, 0, 1, 1], [], []>} : vector<512x36xf32>, vector<36x128xf32>, vector<512x128xf32> -> vector<512x128xf32>
    %c0_3 = arith.constant 0 : index
    %c0_4 = arith.constant 0 : index
    %3 = vector.load %arg3[%c0_3, %c0_4] : memref<1x128xf32, #tpu.memory_space<vmem>>, vector<1x128xf32>
    %4 = vector.broadcast %3 : vector<1x128xf32> to vector<512x128xf32>
    %5 = arith.addf %2, %4 : vector<512x128xf32>
    %6 = arith.negf %5 : vector<512x128xf32>
    %7 = math.exp %6 : vector<512x128xf32>
    %cst_5 = arith.constant 1.000000e+00 : f32
    %8 = vector.broadcast %cst_5 : f32 to vector<512x128xf32>
    %9 = arith.addf %8, %7 : vector<512x128xf32>
    %10 = arith.divf %8, %9 : vector<512x128xf32>
    %c0_6 = arith.constant 0 : index
    %c0_7 = arith.constant 0 : index
    %11 = vector.load %arg4[%c0_6, %c0_7] : memref<512x128xf32, #tpu.memory_space<vmem>>, vector<512x128xf32>
    tpu.vector_store %arg4[%c0_6, %c0_7], %10 {strides = array<i32>} : memref<512x128xf32, #tpu.memory_space<vmem>>, vector<512x128xf32>,
    return
  }
  func.func @transform_0(%arg0: i32) -> (i32, i32) {
    %c0_i32 = arith.constant 0 : i32
    %c0_i32_0 = arith.constant 0 : i32
    return %arg0, %c0_i32 : i32, i32
  }
  func.func @transform_1(%arg0: i32) -> (i32, i32) {
    %c0_i32 = arith.constant 0 : i32
    %c0_i32_0 = arith.constant 0 : i32
    %c0_i32_1 = arith.constant 0 : i32
    return %c0_i32, %c0_i32_0 : i32, i32
  }
  func.func @transform_2(%arg0: i32) -> (i32, i32) {
    %c0_i32 = arith.constant 0 : i32
    %c0_i32_0 = arith.constant 0 : i32
    %c0_i32_1 = arith.constant 0 : i32
    return %c0_i32, %c0_i32_0 : i32, i32
  }
  func.func @transform_3(%arg0: i32) -> (i32, i32) {
    %c0_i32 = arith.constant 0 : i32
    %c0_i32_0 = arith.constant 0 : i32
    return %arg0, %c0_i32 : i32, i32
  }
}

</mosaic_0001>

<llo_original>
// kernel: dae_forward.1
$region0: #{dae_forward.1}
  #allocation0 [shape = 'u32[]', space=smem, size = 0x4, offset = 0x4, fixed_abs, tag = 'smem constant byte address 0x4 - core index']
  #allocation1 [shape = 'u32[72,128]{1,0:T(1,128)}', space=vmem, size = 0x9000, scoped, tag = 'internal scratch']
  %s0 = inlined_call_operand.vmem [shape: f32[512,36], index: 0, kind: input, shape index: {}]
  %s1 = inlined_call_operand.vmem [shape: f32[36,128], index: 1, kind: input, shape index: {}]
  %s2 = inlined_call_operand.vmem [shape: f32[1,128], index: 2, kind: input, shape index: {}]
  %s3 = inlined_call_operand.vmem [shape: f32[512,128], index: 3, kind: output, shape index: {}]
  %s4 = sld [smem:[#allocation0]]
  $region22: #{dae_forward.1} parent=0
    _
  %s6 = ssub.s32 1, %s4
  %s7 = scalar_select 0, %s6, %s4
  // Predicated region
  $region2: #{dae_forward.1} parent=0 // pred_check
    _
  $region3: #{dae_forward.1} parent=0 // pred_check_branch
    %9 = sbr.rel (0) target = $region5
  $region4: #{dae_forward.1} parent=0 // pred_region
    _
  $region5: #{dae_forward.1} parent=0 // pred_fallthru
    _
  // Predicated region
  $region6: #{dae_forward.1} parent=0 // pred_check
    _
  $region7: #{dae_forward.1} parent=0 // pred_check_branch
    %11 = sbr.rel (0) target = $region9
  $region8: #{dae_forward.1} parent=0 // pred_region
    _
  $region9: #{dae_forward.1} parent=0 // pred_fallthru
    _
  // Predicated region
  $region10: #{dae_forward.1} parent=0 // pred_check
    _
  $region11: #{dae_forward.1} parent=0 // pred_check_branch
    %13 = sbr.rel (0) target = $region13
  $region12: #{dae_forward.1} parent=0 // pred_region
    _
  $region13: #{dae_forward.1} parent=0 // pred_fallthru
    _
  %v14 = vld [vmem:[%s0] sm:$0xff]
  %v15 = vld [vmem:[%s0 + $0x8] sm:$0xff]
  %v16 = vld [vmem:[%s0 + $0x10] sm:$0xff]
  %v17 = vld [vmem:[%s0 + $0x18] sm:$0xff]
  %v18 = vld [vmem:[%s0 + $0x20] sm:$0xff]
  %v19 = vld [vmem:[%s0 + $0x28] sm:$0xff]
  %v20 = vld [vmem:[%s0 + $0x30] sm:$0xff]
  %v21 = vld [vmem:[%s0 + $0x38] sm:$0xff]
  %v22 = vld [vmem:[%s0 + $0x40] sm:$0xff]
  %v23 = vld [vmem:[%s0 + $0x48] sm:$0xff]
  %v24 = vld [vmem:[%s0 + $0x50] sm:$0xff]
  %v25 = vld [vmem:[%s0 + $0x58] sm:$0xff]
  %v26 = vld [vmem:[%s0 + $0x60] sm:$0xff]
  %v27 = vld [vmem:[%s0 + $0x68] sm:$0xff]
  %v28 = vld [vmem:[%s0 + $0x70] sm:$0xff]
  %v29 = vld [vmem:[%s0 + $0x78] sm:$0xff]
  %v30 = vld [vmem:[%s0 + $0x80] sm:$0xff]
  %v31 = vld [vmem:[%s0 + $0x88] sm:$0xff]
  %v32 = vld [vmem:[%s0 + $0x90] sm:$0xff]
  %v33 = vld [vmem:[%s0 + $0x98] sm:$0xff]
  %v34 = vld [vmem:[%s0 + $0xa0] sm:$0xff]
  %v35 = vld [vmem:[%s0 + $0xa8] sm:$0xff]
  %v36 = vld [vmem:[%s0 + $0xb0] sm:$0xff]
  %v37 = vld [vmem:[%s0 + $0xb8] sm:$0xff]
  %v38 = vld [vmem:[%s0 + $0xc0] sm:$0xff]
  %v39 = vld [vmem:[%s0 + $0xc8] sm:$0xff]
  %v40 = vld [vmem:[%s0 + $0xd0] sm:$0xff]
  %v41 = vld [vmem:[%s0 + $0xd8] sm:$0xff]
  %v42 = vld [vmem:[%s0 + $0xe0] sm:$0xff]
  %v43 = vld [vmem:[%s0 + $0xe8] sm:$0xff]
  %v44 = vld [vmem:[%s0 + $0xf0] sm:$0xff]
  %v45 = vld [vmem:[%s0 + $0xf8] sm:$0xff]
  %v46 = vld [vmem:[%s0 + $0x100] sm:$0xff]
  %v47 = vld [vmem:[%s0 + $0x108] sm:$0xff]
  %v48 = vld [vmem:[%s0 + $0x110] sm:$0xff]
  %v49 = vld [vmem:[%s0 + $0x118] sm:$0xff]
  %v50 = vld [vmem:[%s0 + $0x120] sm:$0xff]
  %v51 = vld [vmem:[%s0 + $0x128] sm:$0xff]
  %v52 = vld [vmem:[%s0 + $0x130] sm:$0xff]
  %v53 = vld [vmem:[%s0 + $0x138] sm:$0xff]
  %v54 = vld [vmem:[%s0 + $0x140] sm:$0xff]
  %v55 = vld [vmem:[%s0 + $0x148] sm:$0xff]
  %v56 = vld [vmem:[%s0 + $0x150] sm:$0xff]
  %v57 = vld [vmem:[%s0 + $0x158] sm:$0xff]
  %v58 = vld [vmem:[%s0 + $0x160] sm:$0xff]
  %v59 = vld [vmem:[%s0 + $0x168] sm:$0xff]
  %v60 = vld [vmem:[%s0 + $0x170] sm:$0xff]
  %v61 = vld [vmem:[%s0 + $0x178] sm:$0xff]
  %v62 = vld [vmem:[%s0 + $0x180] sm:$0xff]
  %v63 = vld [vmem:[%s0 + $0x188] sm:$0xff]
  %v64 = vld [vmem:[%s0 + $0x190] sm:$0xff]
  %v65 = vld [vmem:[%s0 + $0x198] sm:$0xff]
  %v66 = vld [vmem:[%s0 + $0x1a0] sm:$0xff]
  %v67 = vld [vmem:[%s0 + $0x1a8] sm:$0xff]
  %v68 = vld [vmem:[%s0 + $0x1b0] sm:$0xff]
  %v69 = vld [vmem:[%s0 + $0x1b8] sm:$0xff]
  %v70 = vld [vmem:[%s0 + $0x1c0] sm:$0xff]
  %v71 = vld [vmem:[%s0 + $0x1c8] sm:$0xff]
  %v72 = vld [vmem:[%s0 + $0x1d0] sm:$0xff]
  %v73 = vld [vmem:[%s0 + $0x1d8] sm:$0xff]
  %v74 = vld [vmem:[%s0 + $0x1e0] sm:$0xff]
  %v75 = vld [vmem:[%s0 + $0x1e8] sm:$0xff]
  %v76 = vld [vmem:[%s0 + $0x1f0] sm:$0xff]
  %v77 = vld [vmem:[%s0 + $0x1f8] sm:$0xff]
  %v78 = vld [vmem:[%s1] sm:$0xff]
  %v79 = vld [vmem:[%s1 + $0x8] sm:$0xff]
  %v80 = vld [vmem:[%s1 + $0x10] sm:$0xff]
  %v81 = vld [vmem:[%s1 + $0x18] sm:$0xff]
  %v82 = vld [vmem:[%s1 + $0x20] sm:$0xf]
  %v83 = vld [vmem:[%s2] sm:$0x1]
  %v85 = vperm.slane %v83, 0
  %vm87 = vcmask 293888
  %v89 = vsel %vm87, %v14, 0
  %v92 = vsel %vm87, %v15, 0
  %v95 = vsel %vm87, %v16, 0
  %v98 = vsel %vm87, %v17, 0
  %v101 = vsel %vm87, %v18, 0
  %v104 = vsel %vm87, %v19, 0
  %v107 = vsel %vm87, %v20, 0
  %v110 = vsel %vm87, %v21, 0
  %v113 = vsel %vm87, %v22, 0
  %v116 = vsel %vm87, %v23, 0
  %v119 = vsel %vm87, %v24, 0
  %v122 = vsel %vm87, %v25, 0
  %v125 = vsel %vm87, %v26, 0
  %v128 = vsel %vm87, %v27, 0
  %v131 = vsel %vm87, %v28, 0
  %v134 = vsel %vm87, %v29, 0
  %v137 = vsel %vm87, %v30, 0
  %v140 = vsel %vm87, %v31, 0
  %v143 = vsel %vm87, %v32, 0
  %v146 = vsel %vm87, %v33, 0
  %v149 = vsel %vm87, %v34, 0
  %v152 = vsel %vm87, %v35, 0
  %v155 = vsel %vm87, %v36, 0
  %v158 = vsel %vm87, %v37, 0
  %v161 = vsel %vm87, %v38, 0
  %v164 = vsel %vm87, %v39, 0
  %v167 = vsel %vm87, %v40, 0
  %v170 = vsel %vm87, %v41, 0
  %v173 = vsel %vm87, %v42, 0
  %v176 = vsel %vm87, %v43, 0
  %v179 = vsel %vm87, %v44, 0
  %v182 = vsel %vm87, %v45, 0
  %v185 = vsel %vm87, %v46, 0
  %v188 = vsel %vm87, %v47, 0
  %v191 = vsel %vm87, %v48, 0
  %v194 = vsel %vm87, %v49, 0
  %v197 = vsel %vm87, %v50, 0
  %v200 = vsel %vm87, %v51, 0
  %v203 = vsel %vm87, %v52, 0
  %v206 = vsel %vm87, %v53, 0
  %v209 = vsel %vm87, %v54, 0
  %v212 = vsel %vm87, %v55, 0
  %v215 = vsel %vm87, %v56, 0
  %v218 = vsel %vm87, %v57, 0
  %v221 = vsel %vm87, %v58, 0
  %v224 = vsel %vm87, %v59, 0
  %v227 = vsel %vm87, %v60, 0
  %v230 = vsel %vm87, %v61, 0
  %v233 = vsel %vm87, %v62, 0
  %v236 = vsel %vm87, %v63, 0
  %v239 = vsel %vm87, %v64, 0
  %v242 = vsel %vm87, %v65, 0
  %v245 = vsel %vm87, %v66, 0
  %v248 = vsel %vm87, %v67, 0
  %v251 = vsel %vm87, %v68, 0
  %v254 = vsel %vm87, %v69, 0
  %v257 = vsel %vm87, %v70, 0
  %v260 = vsel %vm87, %v71, 0
  %v263 = vsel %vm87, %v72, 0
  %v266 = vsel %vm87, %v73, 0
  %v269 = vsel %vm87, %v74, 0
  %v272 = vsel %vm87, %v75, 0
  %v275 = vsel %vm87, %v76, 0
  %v278 = vsel %vm87, %v77, 0
  %vm280 = vcmask 1043456
  %v282 = vsel %vm280, %v82, 0
  %284 = vmatpush.msra.mxu0 0.0
  %285 = vmatpush.msra.mxu0 0.0
  %286 = vmatpush.msra.mxu0 0.0
  %287 = vmatpush.msra.mxu0 0.0
  %288 = vmatpush.msra.mxu0 0.0
  %289 = vmatpush.msra.mxu0 0.0
  %290 = vmatpush.msra.mxu0 0.0
  %291 = vmatpush.msra.mxu0 0.0
  %292 = vmatpush.msra.mxu0 0.0
  %293 = vmatpush.msra.mxu0 0.0
  %294 = vmatpush.msra.mxu0 0.0
  %295 = vmatpush.msra.mxu0 %v282
  %296 = vmatpush.msra.mxu0 %v81
  %297 = vmatpush.msra.mxu0 %v80
  %298 = vmatpush.msra.mxu0 %v79
  %299 = vmatpush.msra.mxu0 %v78
  %300 = vmatmul.f32.gmra.mxu0 %v89
  %v301 = vpop.f32.mrf.mxu0
  %v302 = vadd.f32 %v85, %v301
  %303 = vmatmul.f32.gmra.mxu0 %v92
  %v304 = vpop.f32.mrf.mxu0
  %v305 = vadd.f32 %v85, %v304
  %306 = vmatmul.f32.gmra.mxu0 %v95
  %v307 = vpop.f32.mrf.mxu0
  %v308 = vadd.f32 %v85, %v307
  %309 = vmatmul.f32.gmra.mxu0 %v98
  %v310 = vpop.f32.mrf.mxu0
  %v311 = vadd.f32 %v85, %v310
  %312 = vmatmul.f32.gmra.mxu0 %v101
  %v313 = vpop.f32.mrf.mxu0
  %v314 = vadd.f32 %v85, %v313
  %315 = vmatmul.f32.gmra.mxu0 %v104
  %v316 = vpop.f32.mrf.mxu0
  %v317 = vadd.f32 %v85, %v316
  %318 = vmatmul.f32.gmra.mxu0 %v107
  %v319 = vpop.f32.mrf.mxu0
  %v320 = vadd.f32 %v85, %v319
  %321 = vmatmul.f32.gmra.mxu0 %v110
  %v322 = vpop.f32.mrf.mxu0
  %v323 = vadd.f32 %v85, %v322
  %324 = vmatmul.f32.gmra.mxu0 %v113
  %v325 = vpop.f32.mrf.mxu0
  %v326 = vadd.f32 %v85, %v325
  %327 = vmatmul.f32.gmra.mxu0 %v116
  %v328 = vpop.f32.mrf.mxu0
  %v329 = vadd.f32 %v85, %v328
  %330 = vmatmul.f32.gmra.mxu0 %v119
  %v331 = vpop.f32.mrf.mxu0
  %v332 = vadd.f32 %v85, %v331
  %333 = vmatmul.f32.gmra.mxu0 %v122
  %v334 = vpop.f32.mrf.mxu0
  %v335 = vadd.f32 %v85, %v334
  %336 = vmatmul.f32.gmra.mxu0 %v125
  %v337 = vpop.f32.mrf.mxu0
  %v338 = vadd.f32 %v85, %v337
  %339 = vmatmul.f32.gmra.mxu0 %v128
  %v340 = vpop.f32.mrf.mxu0
  %v341 = vadd.f32 %v85, %v340
  %342 = vmatmul.f32.gmra.mxu0 %v131
  %v343 = vpop.f32.mrf.mxu0
  %v344 = vadd.f32 %v85, %v343
  %345 = vmatmul.f32.gmra.mxu0 %v134
  %v346 = vpop.f32.mrf.mxu0
  %v347 = vadd.f32 %v85, %v346
  %348 = vmatmul.f32.gmra.mxu0 %v137
  %v349 = vpop.f32.mrf.mxu0
  %v350 = vadd.f32 %v85, %v349
  %351 = vmatmul.f32.gmra.mxu0 %v140
  %v352 = vpop.f32.mrf.mxu0
  %v353 = vadd.f32 %v85, %v352
  %354 = vmatmul.f32.gmra.mxu0 %v143
  %v355 = vpop.f32.mrf.mxu0
  %v356 = vadd.f32 %v85, %v355
  %357 = vmatmul.f32.gmra.mxu0 %v146
  %v358 = vpop.f32.mrf.mxu0
  %v359 = vadd.f32 %v85, %v358
  %360 = vmatmul.f32.gmra.mxu0 %v149
  %v361 = vpop.f32.mrf.mxu0
  %v362 = vadd.f32 %v85, %v361
  %363 = vmatmul.f32.gmra.mxu0 %v152
  %v364 = vpop.f32.mrf.mxu0
  %v365 = vadd.f32 %v85, %v364
  %366 = vmatmul.f32.gmra.mxu0 %v155
  %v367 = vpop.f32.mrf.mxu0
  %v368 = vadd.f32 %v85, %v367
  %369 = vmatmul.f32.gmra.mxu0 %v158
  %v370 = vpop.f32.mrf.mxu0
  %v371 = vadd.f32 %v85, %v370
  %372 = vmatmul.f32.gmra.mxu0 %v161
  %v373 = vpop.f32.mrf.mxu0
  %v374 = vadd.f32 %v85, %v373
  %375 = vmatmul.f32.gmra.mxu0 %v164
  %v376 = vpop.f32.mrf.mxu0
  %v377 = vadd.f32 %v85, %v376
  %378 = vmatmul.f32.gmra.mxu0 %v167
  %v379 = vpop.f32.mrf.mxu0
  %v380 = vadd.f32 %v85, %v379
  %381 = vmatmul.f32.gmra.mxu0 %v170
  %v382 = vpop.f32.mrf.mxu0
  %v383 = vadd.f32 %v85, %v382
  %384 = vmatmul.f32.gmra.mxu0 %v173
  %v385 = vpop.f32.mrf.mxu0
  %v386 = vadd.f32 %v85, %v385
  %387 = vmatmul.f32.gmra.mxu0 %v176
  %v388 = vpop.f32.mrf.mxu0
  %v389 = vadd.f32 %v85, %v388
  %390 = vmatmul.f32.gmra.mxu0 %v179
  %v391 = vpop.f32.mrf.mxu0
  %v392 = vadd.f32 %v85, %v391
  %393 = vmatmul.f32.gmra.mxu0 %v182
  %v394 = vpop.f32.mrf.mxu0
  %v395 = vadd.f32 %v85, %v394
  %396 = vmatmul.f32.gmra.mxu0 %v185
  %v397 = vpop.f32.mrf.mxu0
  %v398 = vadd.f32 %v85, %v397
  %399 = vmatmul.f32.gmra.mxu0 %v188
  %v400 = vpop.f32.mrf.mxu0
  %v401 = vadd.f32 %v85, %v400
  %402 = vmatmul.f32.gmra.mxu0 %v191
  %v403 = vpop.f32.mrf.mxu0
  %v404 = vadd.f32 %v85, %v403
  %405 = vmatmul.f32.gmra.mxu0 %v194
  %v406 = vpop.f32.mrf.mxu0
  %v407 = vadd.f32 %v85, %v406
  %408 = vmatmul.f32.gmra.mxu0 %v197
  %v409 = vpop.f32.mrf.mxu0
  %v410 = vadd.f32 %v85, %v409
  %411 = vmatmul.f32.gmra.mxu0 %v200
  %v412 = vpop.f32.mrf.mxu0
  %v413 = vadd.f32 %v85, %v412
  %414 = vmatmul.f32.gmra.mxu0 %v203
  %v415 = vpop.f32.mrf.mxu0
  %v416 = vadd.f32 %v85, %v415
  %417 = vmatmul.f32.gmra.mxu0 %v206
  %v418 = vpop.f32.mrf.mxu0
  %v419 = vadd.f32 %v85, %v418
  %420 = vmatmul.f32.gmra.mxu0 %v209
  %v421 = vpop.f32.mrf.mxu0
  %v422 = vadd.f32 %v85, %v421
  %423 = vmatmul.f32.gmra.mxu0 %v212
  %v424 = vpop.f32.mrf.mxu0
  %v425 = vadd.f32 %v85, %v424
  %426 = vmatmul.f32.gmra.mxu0 %v215
  %v427 = vpop.f32.mrf.mxu0
  %v428 = vadd.f32 %v85, %v427
  %429 = vmatmul.f32.gmra.mxu0 %v218
  %v430 = vpop.f32.mrf.mxu0
  %v431 = vadd.f32 %v85, %v430
  %432 = vmatmul.f32.gmra.mxu0 %v221
  %v433 = vpop.f32.mrf.mxu0
  %v434 = vadd.f32 %v85, %v433
  %435 = vmatmul.f32.gmra.mxu0 %v224
  %v436 = vpop.f32.mrf.mxu0
  %v437 = vadd.f32 %v85, %v436
  %438 = vmatmul.f32.gmra.mxu0 %v227
  %v439 = vpop.f32.mrf.mxu0
  %v440 = vadd.f32 %v85, %v439
  %441 = vmatmul.f32.gmra.mxu0 %v230
  %v442 = vpop.f32.mrf.mxu0
  %v443 = vadd.f32 %v85, %v442
  %444 = vmatmul.f32.gmra.mxu0 %v233
  %v445 = vpop.f32.mrf.mxu0
  %v446 = vadd.f32 %v85, %v445
  %447 = vmatmul.f32.gmra.mxu0 %v236
  %v448 = vpop.f32.mrf.mxu0
  %v449 = vadd.f32 %v85, %v448
  %450 = vmatmul.f32.gmra.mxu0 %v239
  %v451 = vpop.f32.mrf.mxu0
  %v452 = vadd.f32 %v85, %v451
  %453 = vmatmul.f32.gmra.mxu0 %v242
  %v454 = vpop.f32.mrf.mxu0
  %v455 = vadd.f32 %v85, %v454
  %456 = vmatmul.f32.gmra.mxu0 %v245
  %v457 = vpop.f32.mrf.mxu0
  %v458 = vadd.f32 %v85, %v457
  %459 = vmatmul.f32.gmra.mxu0 %v248
  %v460 = vpop.f32.mrf.mxu0
  %v461 = vadd.f32 %v85, %v460
  %462 = vmatmul.f32.gmra.mxu0 %v251
  %v463 = vpop.f32.mrf.mxu0
  %v464 = vadd.f32 %v85, %v463
  %465 = vmatmul.f32.gmra.mxu0 %v254
  %v466 = vpop.f32.mrf.mxu0
  %v467 = vadd.f32 %v85, %v466
  %468 = vmatmul.f32.gmra.mxu0 %v257
  %v469 = vpop.f32.mrf.mxu0
  %v470 = vadd.f32 %v85, %v469
  %471 = vmatmul.f32.gmra.mxu0 %v260
  %v472 = vpop.f32.mrf.mxu0
  %v473 = vadd.f32 %v85, %v472
  %474 = vmatmul.f32.gmra.mxu0 %v263
  %v475 = vpop.f32.mrf.mxu0
  %v476 = vadd.f32 %v85, %v475
  %477 = vmatmul.f32.gmra.mxu0 %v266
  %v478 = vpop.f32.mrf.mxu0
  %v479 = vadd.f32 %v85, %v478
  %480 = vmatmul.f32.gmra.mxu0 %v269
  %v481 = vpop.f32.mrf.mxu0
  %v482 = vadd.f32 %v85, %v481
  %483 = vmatmul.f32.gmra.mxu0 %v272
  %v484 = vpop.f32.mrf.mxu0
  %v485 = vadd.f32 %v85, %v484
  %486 = vmatmul.f32.gmra.mxu0 %v275
  %v487 = vpop.f32.mrf.mxu0
  %v488 = vadd.f32 %v85, %v487
  %489 = vmatmul.f32.gmra.mxu0 %v278
  %v490 = vpop.f32.mrf.mxu0
  %v491 = vadd.f32 %v85, %v490
  %492 = vdwg.mxu0
  %v493 = vxor.u32 %v302, 2147483648
  %v494 = vxor.u32 %v305, 2147483648
  %v495 = vxor.u32 %v308, 2147483648
  %v496 = vxor.u32 %v311, 2147483648
  %v497 = vxor.u32 %v314, 2147483648
  %v498 = vxor.u32 %v317, 2147483648
  %v499 = vxor.u32 %v320, 2147483648
  %v500 = vxor.u32 %v323, 2147483648
  %v501 = vxor.u32 %v326, 2147483648
  %v502 = vxor.u32 %v329, 2147483648
  %v503 = vxor.u32 %v332, 2147483648
  %v504 = vxor.u32 %v335, 2147483648
  %v505 = vxor.u32 %v338, 2147483648
  %v506 = vxor.u32 %v341, 2147483648
  %v507 = vxor.u32 %v344, 2147483648
  %v508 = vxor.u32 %v347, 2147483648
  %v509 = vxor.u32 %v350, 2147483648
  %v510 = vxor.u32 %v353, 2147483648
  %v511 = vxor.u32 %v356, 2147483648
  %v512 = vxor.u32 %v359, 2147483648
  %v513 = vxor.u32 %v362, 2147483648
  %v514 = vxor.u32 %v365, 2147483648
  %v515 = vxor.u32 %v368, 2147483648
  %v516 = vxor.u32 %v371, 2147483648
  %v517 = vxor.u32 %v374, 2147483648
  %v518 = vxor.u32 %v377, 2147483648
  %v519 = vxor.u32 %v380, 2147483648
  %v520 = vxor.u32 %v383, 2147483648
  %v521 = vxor.u32 %v386, 2147483648
  %v522 = vxor.u32 %v389, 2147483648
  %v523 = vxor.u32 %v392, 2147483648
  %v524 = vxor.u32 %v395, 2147483648
  %v525 = vxor.u32 %v398, 2147483648
  %v526 = vxor.u32 %v401, 2147483648
  %v527 = vxor.u32 %v404, 2147483648
  %v528 = vxor.u32 %v407, 2147483648
  %v529 = vxor.u32 %v410, 2147483648
  %v530 = vxor.u32 %v413, 2147483648
  %v531 = vxor.u32 %v416, 2147483648
  %v532 = vxor.u32 %v419, 2147483648
  %v533 = vxor.u32 %v422, 2147483648
  %v534 = vxor.u32 %v425, 2147483648
  %v535 = vxor.u32 %v428, 2147483648
  %v536 = vxor.u32 %v431, 2147483648
  %v537 = vxor.u32 %v434, 2147483648
  %v538 = vxor.u32 %v437, 2147483648
  %v539 = vxor.u32 %v440, 2147483648
  %v540 = vxor.u32 %v443, 2147483648
  %v541 = vxor.u32 %v446, 2147483648
  %v542 = vxor.u32 %v449, 2147483648
  %v543 = vxor.u32 %v452, 2147483648
  %v544 = vxor.u32 %v455, 2147483648
  %v545 = vxor.u32 %v458, 2147483648
  %v546 = vxor.u32 %v461, 2147483648
  %v547 = vxor.u32 %v464, 2147483648
  %v548 = vxor.u32 %v467, 2147483648
  %v549 = vxor.u32 %v470, 2147483648
  %v550 = vxor.u32 %v473, 2147483648
  %v551 = vxor.u32 %v476, 2147483648
  %v552 = vxor.u32 %v479, 2147483648
  %v553 = vxor.u32 %v482, 2147483648
  %v554 = vxor.u32 %v485, 2147483648
  %v555 = vxor.u32 %v488, 2147483648
  %v556 = vxor.u32 %v491, 2147483648
  %v557 = vmul.f32 %v493, 1.442695
  %v558 = vpow.pop %v557
  %v559 = vmul.f32 %v494, 1.442695
  %v560 = vpow.pop %v559
  %v561 = vmul.f32 %v495, 1.442695
  %v562 = vpow.pop %v561
  %v563 = vmul.f32 %v496, 1.442695
  %v564 = vpow.pop %v563
  %v565 = vmul.f32 %v497, 1.442695
  %v566 = vpow.pop %v565
  %v567 = vmul.f32 %v498, 1.442695
  %v568 = vpow.pop %v567
  %v569 = vmul.f32 %v499, 1.442695
  %v570 = vpow.pop %v569
  %v571 = vmul.f32 %v500, 1.442695
  %v572 = vpow.pop %v571
  %v573 = vmul.f32 %v501, 1.442695
  %v574 = vpow.pop %v573
  %v575 = vmul.f32 %v502, 1.442695
  %v576 = vpow.pop %v575
  %v577 = vmul.f32 %v503, 1.442695
  %v578 = vpow.pop %v577
  %v579 = vmul.f32 %v504, 1.442695
  %v580 = vpow.pop %v579
  %v581 = vmul.f32 %v505, 1.442695
  %v582 = vpow.pop %v581
  %v583 = vmul.f32 %v506, 1.442695
  %v584 = vpow.pop %v583
  %v585 = vmul.f32 %v507, 1.442695
  %v586 = vpow.pop %v585
  %v587 = vmul.f32 %v508, 1.442695
  %v588 = vpow.pop %v587
  %v589 = vmul.f32 %v509, 1.442695
  %v590 = vpow.pop %v589
  %v591 = vmul.f32 %v510, 1.442695
  %v592 = vpow.pop %v591
  %v593 = vmul.f32 %v511, 1.442695
  %v594 = vpow.pop %v593
  %v595 = vmul.f32 %v512, 1.442695
  %v596 = vpow.pop %v595
  %v597 = vmul.f32 %v513, 1.442695
  %v598 = vpow.pop %v597
  %v599 = vmul.f32 %v514, 1.442695
  %v600 = vpow.pop %v599
  %v601 = vmul.f32 %v515, 1.442695
  %v602 = vpow.pop %v601
  %v603 = vmul.f32 %v516, 1.442695
  %v604 = vpow.pop %v603
  %v605 = vmul.f32 %v517, 1.442695
  %v606 = vpow.pop %v605
  %v607 = vmul.f32 %v518, 1.442695
  %v608 = vpow.pop %v607
  %v609 = vmul.f32 %v519, 1.442695
  %v610 = vpow.pop %v609
  %v611 = vmul.f32 %v520, 1.442695
  %v612 = vpow.pop %v611
  %v613 = vmul.f32 %v521, 1.442695
  %v614 = vpow.pop %v613
  %v615 = vmul.f32 %v522, 1.442695
  %v616 = vpow.pop %v615
  %v617 = vmul.f32 %v523, 1.442695
  %v618 = vpow.pop %v617
  %v619 = vmul.f32 %v524, 1.442695
  %v620 = vpow.pop %v619
  %v621 = vmul.f32 %v525, 1.442695
  %v622 = vpow.pop %v621
  %v623 = vmul.f32 %v526, 1.442695
  %v624 = vpow.pop %v623
  %v625 = vmul.f32 %v527, 1.442695
  %v626 = vpow.pop %v625
  %v627 = vmul.f32 %v528, 1.442695
  %v628 = vpow.pop %v627
  %v629 = vmul.f32 %v529, 1.442695
  %v630 = vpow.pop %v629
  %v631 = vmul.f32 %v530, 1.442695
  %v632 = vpow.pop %v631
  %v633 = vmul.f32 %v531, 1.442695
  %v634 = vpow.pop %v633
  %v635 = vmul.f32 %v532, 1.442695
  %v636 = vpow.pop %v635
  %v637 = vmul.f32 %v533, 1.442695
  %v638 = vpow.pop %v637
  %v639 = vmul.f32 %v534, 1.442695
  %v640 = vpow.pop %v639
  %v641 = vmul.f32 %v535, 1.442695
  %v642 = vpow.pop %v641
  %v643 = vmul.f32 %v536, 1.442695
  %v644 = vpow.pop %v643
  %v645 = vmul.f32 %v537, 1.442695
  %v646 = vpow.pop %v645
  %v647 = vmul.f32 %v538, 1.442695
  %v648 = vpow.pop %v647
  %v649 = vmul.f32 %v539, 1.442695
  %v650 = vpow.pop %v649
  %v651 = vmul.f32 %v540, 1.442695
  %v652 = vpow.pop %v651
  %v653 = vmul.f32 %v541, 1.442695
  %v654 = vpow.pop %v653
  %v655 = vmul.f32 %v542, 1.442695
  %v656 = vpow.pop %v655
  %v657 = vmul.f32 %v543, 1.442695
  %v658 = vpow.pop %v657
  %v659 = vmul.f32 %v544, 1.442695
  %v660 = vpow.pop %v659
  %v661 = vmul.f32 %v545, 1.442695
  %v662 = vpow.pop %v661
  %v663 = vmul.f32 %v546, 1.442695
  %v664 = vpow.pop %v663
  %v665 = vmul.f32 %v547, 1.442695
  %v666 = vpow.pop %v665
  %v667 = vmul.f32 %v548, 1.442695
  %v668 = vpow.pop %v667
  %v669 = vmul.f32 %v549, 1.442695
  %v670 = vpow.pop %v669
  %v671 = vmul.f32 %v550, 1.442695
  %v672 = vpow.pop %v671
  %v673 = vmul.f32 %v551, 1.442695
  %v674 = vpow.pop %v673
  %v675 = vmul.f32 %v552, 1.442695
  %v676 = vpow.pop %v675
  %v677 = vmul.f32 %v553, 1.442695
  %v678 = vpow.pop %v677
  %v679 = vmul.f32 %v554, 1.442695
  %v680 = vpow.pop %v679
  %v681 = vmul.f32 %v555, 1.442695
  %v682 = vpow.pop %v681
  %v683 = vmul.f32 %v556, 1.442695
  %v684 = vpow.pop %v683
  %v685 = vadd.f32 %v558, 1.0
  %v686 = vadd.f32 %v560, 1.0
  %v687 = vadd.f32 %v562, 1.0
  %v688 = vadd.f32 %v564, 1.0
  %v689 = vadd.f32 %v566, 1.0
  %v690 = vadd.f32 %v568, 1.0
  %v691 = vadd.f32 %v570, 1.0
  %v692 = vadd.f32 %v572, 1.0
  %v693 = vadd.f32 %v574, 1.0
  %v694 = vadd.f32 %v576, 1.0
  %v695 = vadd.f32 %v578, 1.0
  %v696 = vadd.f32 %v580, 1.0
  %v697 = vadd.f32 %v582, 1.0
  %v698 = vadd.f32 %v584, 1.0
  %v699 = vadd.f32 %v586, 1.0
  %v700 = vadd.f32 %v588, 1.0
  %v701 = vadd.f32 %v590, 1.0
  %v702 = vadd.f32 %v592, 1.0
  %v703 = vadd.f32 %v594, 1.0
  %v704 = vadd.f32 %v596, 1.0
  %v705 = vadd.f32 %v598, 1.0
  %v706 = vadd.f32 %v600, 1.0
  %v707 = vadd.f32 %v602, 1.0
  %v708 = vadd.f32 %v604, 1.0
  %v709 = vadd.f32 %v606, 1.0
  %v710 = vadd.f32 %v608, 1.0
  %v711 = vadd.f32 %v610, 1.0
  %v712 = vadd.f32 %v612, 1.0
  %v713 = vadd.f32 %v614, 1.0
  %v714 = vadd.f32 %v616, 1.0
  %v715 = vadd.f32 %v618, 1.0
  %v716 = vadd.f32 %v620, 1.0
  %v717 = vadd.f32 %v622, 1.0
  %v718 = vadd.f32 %v624, 1.0
  %v719 = vadd.f32 %v626, 1.0
  %v720 = vadd.f32 %v628, 1.0
  %v721 = vadd.f32 %v630, 1.0
  %v722 = vadd.f32 %v632, 1.0
  %v723 = vadd.f32 %v634, 1.0
  %v724 = vadd.f32 %v636, 1.0
  %v725 = vadd.f32 %v638, 1.0
  %v726 = vadd.f32 %v640, 1.0
  %v727 = vadd.f32 %v642, 1.0
  %v728 = vadd.f32 %v644, 1.0
  %v729 = vadd.f32 %v646, 1.0
  %v730 = vadd.f32 %v648, 1.0
  %v731 = vadd.f32 %v650, 1.0
  %v732 = vadd.f32 %v652, 1.0
  %v733 = vadd.f32 %v654, 1.0
  %v734 = vadd.f32 %v656, 1.0
  %v735 = vadd.f32 %v658, 1.0
  %v736 = vadd.f32 %v660, 1.0
  %v737 = vadd.f32 %v662, 1.0
  %v738 = vadd.f32 %v664, 1.0
  %v739 = vadd.f32 %v666, 1.0
  %v740 = vadd.f32 %v668, 1.0
  %v741 = vadd.f32 %v670, 1.0
  %v742 = vadd.f32 %v672, 1.0
  %v743 = vadd.f32 %v674, 1.0
  %v744 = vadd.f32 %v676, 1.0
  %v745 = vadd.f32 %v678, 1.0
  %v746 = vadd.f32 %v680, 1.0
  %v747 = vadd.f32 %v682, 1.0
  %v748 = vadd.f32 %v684, 1.0
  %v749 = vrcp.pop %v685
  %v750 = vmul.f32 %v685, %v749
  %v751 = vsub.f32 1.0, %v750
  %v752 = vmul.f32 %v749, %v751
  %v753 = vadd.f32 %v749, %v752
  %vm754 = vweird.f32 %v685
  %vm755 = vweird.f32 %v749
  %vm756 = vmor %vm754, %vm755
  %v757 = vsel %vm756, %v749, %v753
  %v758 = vand.u32 2147483647, %v685
  %vm759 = vcmp.eq.f32.partialorder %v758, 8.507059e+37
  %v760 = vand.u32 %v685, 2147483648
  %v761 = vor.u32 1.1754944e-38, %v760
  %v762 = vsel %vm759, %v761, %v757
  %v763 = vmul.f32 1.0, %v762
  %v764 = vrcp.pop %v686
  %v765 = vmul.f32 %v686, %v764
  %v766 = vsub.f32 1.0, %v765
  %v767 = vmul.f32 %v764, %v766
  %v768 = vadd.f32 %v764, %v767
  %vm769 = vweird.f32 %v686
  %vm770 = vweird.f32 %v764
  %vm771 = vmor %vm769, %vm770
  %v772 = vsel %vm771, %v764, %v768
  %v773 = vand.u32 2147483647, %v686
  %vm774 = vcmp.eq.f32.partialorder %v773, 8.507059e+37
  %v775 = vand.u32 %v686, 2147483648
  %v776 = vor.u32 1.1754944e-38, %v775
  %v777 = vsel %vm774, %v776, %v772
  %v778 = vmul.f32 1.0, %v777
  %v779 = vrcp.pop %v687
  %v780 = vmul.f32 %v687, %v779
  %v781 = vsub.f32 1.0, %v780
  %v782 = vmul.f32 %v779, %v781
  %v783 = vadd.f32 %v779, %v782
  %vm784 = vweird.f32 %v687
  %vm785 = vweird.f32 %v779
  %vm786 = vmor %vm784, %vm785
  %v787 = vsel %vm786, %v779, %v783
  %v788 = vand.u32 2147483647, %v687
  %vm789 = vcmp.eq.f32.partialorder %v788, 8.507059e+37
  %v790 = vand.u32 %v687, 2147483648
  %v791 = vor.u32 1.1754944e-38, %v790
  %v792 = vsel %vm789, %v791, %v787
  %v793 = vmul.f32 1.0, %v792
  %v794 = vrcp.pop %v688
  %v795 = vmul.f32 %v688, %v794
  %v796 = vsub.f32 1.0, %v795
  %v797 = vmul.f32 %v794, %v796
  %v798 = vadd.f32 %v794, %v797
  %vm799 = vweird.f32 %v688
  %vm800 = vweird.f32 %v794
  %vm801 = vmor %vm799, %vm800
  %v802 = vsel %vm801, %v794, %v798
  %v803 = vand.u32 2147483647, %v688
  %vm804 = vcmp.eq.f32.partialorder %v803, 8.507059e+37
  %v805 = vand.u32 %v688, 2147483648
  %v806 = vor.u32 1.1754944e-38, %v805
  %v807 = vsel %vm804, %v806, %v802
  %v808 = vmul.f32 1.0, %v807
  %v809 = vrcp.pop %v689
  %v810 = vmul.f32 %v689, %v809
  %v811 = vsub.f32 1.0, %v810
  %v812 = vmul.f32 %v809, %v811
  %v813 = vadd.f32 %v809, %v812
  %vm814 = vweird.f32 %v689
  %vm815 = vweird.f32 %v809
  %vm816 = vmor %vm814, %vm815
  %v817 = vsel %vm816, %v809, %v813
  %v818 = vand.u32 2147483647, %v689
  %vm819 = vcmp.eq.f32.partialorder %v818, 8.507059e+37
  %v820 = vand.u32 %v689, 2147483648
  %v821 = vor.u32 1.1754944e-38, %v820
  %v822 = vsel %vm819, %v821, %v817
  %v823 = vmul.f32 1.0, %v822
  %v824 = vrcp.pop %v690
  %v825 = vmul.f32 %v690, %v824
  %v826 = vsub.f32 1.0, %v825
  %v827 = vmul.f32 %v824, %v826
  %v828 = vadd.f32 %v824, %v827
  %vm829 = vweird.f32 %v690
  %vm830 = vweird.f32 %v824
  %vm831 = vmor %vm829, %vm830
  %v832 = vsel %vm831, %v824, %v828
  %v833 = vand.u32 2147483647, %v690
  %vm834 = vcmp.eq.f32.partialorder %v833, 8.507059e+37
  %v835 = vand.u32 %v690, 2147483648
  %v836 = vor.u32 1.1754944e-38, %v835
  %v837 = vsel %vm834, %v836, %v832
  %v838 = vmul.f32 1.0, %v837
  %v839 = vrcp.pop %v691
  %v840 = vmul.f32 %v691, %v839
  %v841 = vsub.f32 1.0, %v840
  %v842 = vmul.f32 %v839, %v841
  %v843 = vadd.f32 %v839, %v842
  %vm844 = vweird.f32 %v691
  %vm845 = vweird.f32 %v839
  %vm846 = vmor %vm844, %vm845
  %v847 = vsel %vm846, %v839, %v843
  %v848 = vand.u32 2147483647, %v691
  %vm849 = vcmp.eq.f32.partialorder %v848, 8.507059e+37
  %v850 = vand.u32 %v691, 2147483648
  %v851 = vor.u32 1.1754944e-38, %v850
  %v852 = vsel %vm849, %v851, %v847
  %v853 = vmul.f32 1.0, %v852
  %v854 = vrcp.pop %v692
  %v855 = vmul.f32 %v692, %v854
  %v856 = vsub.f32 1.0, %v855
  %v857 = vmul.f32 %v854, %v856
  %v858 = vadd.f32 %v854, %v857
  %vm859 = vweird.f32 %v692
  %vm860 = vweird.f32 %v854
  %vm861 = vmor %vm859, %vm860
  %v862 = vsel %vm861, %v854, %v858
  %v863 = vand.u32 2147483647, %v692
  %vm864 = vcmp.eq.f32.partialorder %v863, 8.507059e+37
  %v865 = vand.u32 %v692, 2147483648
  %v866 = vor.u32 1.1754944e-38, %v865
  %v867 = vsel %vm864, %v866, %v862
  %v868 = vmul.f32 1.0, %v867
  %v869 = vrcp.pop %v693
  %v870 = vmul.f32 %v693, %v869
  %v871 = vsub.f32 1.0, %v870
  %v872 = vmul.f32 %v869, %v871
  %v873 = vadd.f32 %v869, %v872
  %vm874 = vweird.f32 %v693
  %vm875 = vweird.f32 %v869
  %vm876 = vmor %vm874, %vm875
  %v877 = vsel %vm876, %v869, %v873
  %v878 = vand.u32 2147483647, %v693
  %vm879 = vcmp.eq.f32.partialorder %v878, 8.507059e+37
  %v880 = vand.u32 %v693, 2147483648
  %v881 = vor.u32 1.1754944e-38, %v880
  %v882 = vsel %vm879, %v881, %v877
  %v883 = vmul.f32 1.0, %v882
  %v884 = vrcp.pop %v694
  %v885 = vmul.f32 %v694, %v884
  %v886 = vsub.f32 1.0, %v885
  %v887 = vmul.f32 %v884, %v886
  %v888 = vadd.f32 %v884, %v887
  %vm889 = vweird.f32 %v694
  %vm890 = vweird.f32 %v884
  %vm891 = vmor %vm889, %vm890
  %v892 = vsel %vm891, %v884, %v888
  %v893 = vand.u32 2147483647, %v694
  %vm894 = vcmp.eq.f32.partialorder %v893, 8.507059e+37
  %v895 = vand.u32 %v694, 2147483648
  %v896 = vor.u32 1.1754944e-38, %v895
  %v897 = vsel %vm894, %v896, %v892
  %v898 = vmul.f32 1.0, %v897
  %v899 = vrcp.pop %v695
  %v900 = vmul.f32 %v695, %v899
  %v901 = vsub.f32 1.0, %v900
  %v902 = vmul.f32 %v899, %v901
  %v903 = vadd.f32 %v899, %v902
  %vm904 = vweird.f32 %v695
  %vm905 = vweird.f32 %v899
  %vm906 = vmor %vm904, %vm905
  %v907 = vsel %vm906, %v899, %v903
  %v908 = vand.u32 2147483647, %v695
  %vm909 = vcmp.eq.f32.partialorder %v908, 8.507059e+37
  %v910 = vand.u32 %v695, 2147483648
  %v911 = vor.u32 1.1754944e-38, %v910
  %v912 = vsel %vm909, %v911, %v907
  %v913 = vmul.f32 1.0, %v912
  %v914 = vrcp.pop %v696
  %v915 = vmul.f32 %v696, %v914
  %v916 = vsub.f32 1.0, %v915
  %v917 = vmul.f32 %v914, %v916
  %v918 = vadd.f32 %v914, %v917
  %vm919 = vweird.f32 %v696
  %vm920 = vweird.f32 %v914
  %vm921 = vmor %vm919, %vm920
  %v922 = vsel %vm921, %v914, %v918
  %v923 = vand.u32 2147483647, %v696
  %vm924 = vcmp.eq.f32.partialorder %v923, 8.507059e+37
  %v925 = vand.u32 %v696, 2147483648
  %v926 = vor.u32 1.1754944e-38, %v925
  %v927 = vsel %vm924, %v926, %v922
  %v928 = vmul.f32 1.0, %v927
  %v929 = vrcp.pop %v697
  %v930 = vmul.f32 %v697, %v929
  %v931 = vsub.f32 1.0, %v930
  %v932 = vmul.f32 %v929, %v931
  %v933 = vadd.f32 %v929, %v932
  %vm934 = vweird.f32 %v697
  %vm935 = vweird.f32 %v929
  %vm936 = vmor %vm934, %vm935
  %v937 = vsel %vm936, %v929, %v933
  %v938 = vand.u32 2147483647, %v697
  %vm939 = vcmp.eq.f32.partialorder %v938, 8.507059e+37
  %v940 = vand.u32 %v697, 2147483648
  %v941 = vor.u32 1.1754944e-38, %v940
  %v942 = vsel %vm939, %v941, %v937
  %v943 = vmul.f32 1.0, %v942
  %v944 = vrcp.pop %v698
  %v945 = vmul.f32 %v698, %v944
  %v946 = vsub.f32 1.0, %v945
  %v947 = vmul.f32 %v944, %v946
  %v948 = vadd.f32 %v944, %v947
  %vm949 = vweird.f32 %v698
  %vm950 = vweird.f32 %v944
  %vm951 = vmor %vm949, %vm950
  %v952 = vsel %vm951, %v944, %v948
  %v953 = vand.u32 2147483647, %v698
  %vm954 = vcmp.eq.f32.partialorder %v953, 8.507059e+37
  %v955 = vand.u32 %v698, 2147483648
  %v956 = vor.u32 1.1754944e-38, %v955
  %v957 = vsel %vm954, %v956, %v952
  %v958 = vmul.f32 1.0, %v957
  %v959 = vrcp.pop %v699
  %v960 = vmul.f32 %v699, %v959
  %v961 = vsub.f32 1.0, %v960
  %v962 = vmul.f32 %v959, %v961
  %v963 = vadd.f32 %v959, %v962
  %vm964 = vweird.f32 %v699
  %vm965 = vweird.f32 %v959
  %vm966 = vmor %vm964, %vm965
  %v967 = vsel %vm966, %v959, %v963
  %v968 = vand.u32 2147483647, %v699
  %vm969 = vcmp.eq.f32.partialorder %v968, 8.507059e+37
  %v970 = vand.u32 %v699, 2147483648
  %v971 = vor.u32 1.1754944e-38, %v970
  %v972 = vsel %vm969, %v971, %v967
  %v973 = vmul.f32 1.0, %v972
  %v974 = vrcp.pop %v700
  %v975 = vmul.f32 %v700, %v974
  %v976 = vsub.f32 1.0, %v975
  %v977 = vmul.f32 %v974, %v976
  %v978 = vadd.f32 %v974, %v977
  %vm979 = vweird.f32 %v700
  %vm980 = vweird.f32 %v974
  %vm981 = vmor %vm979, %vm980
  %v982 = vsel %vm981, %v974, %v978
  %v983 = vand.u32 2147483647, %v700
  %vm984 = vcmp.eq.f32.partialorder %v983, 8.507059e+37
  %v985 = vand.u32 %v700, 2147483648
  %v986 = vor.u32 1.1754944e-38, %v985
  %v987 = vsel %vm984, %v986, %v982
  %v988 = vmul.f32 1.0, %v987
  %v989 = vrcp.pop %v701
  %v990 = vmul.f32 %v701, %v989
  %v991 = vsub.f32 1.0, %v990
  %v992 = vmul.f32 %v989, %v991
  %v993 = vadd.f32 %v989, %v992
  %vm994 = vweird.f32 %v701
  %vm995 = vweird.f32 %v989
  %vm996 = vmor %vm994, %vm995
  %v997 = vsel %vm996, %v989, %v993
  %v998 = vand.u32 2147483647, %v701
  %vm999 = vcmp.eq.f32.partialorder %v998, 8.507059e+37
  %v1000 = vand.u32 %v701, 2147483648
  %v1001 = vor.u32 1.1754944e-38, %v1000
  %v1002 = vsel %vm999, %v1001, %v997
  %v1003 = vmul.f32 1.0, %v1002
  %v1004 = vrcp.pop %v702
  %v1005 = vmul.f32 %v702, %v1004
  %v1006 = vsub.f32 1.0, %v1005
  %v1007 = vmul.f32 %v1004, %v1006
  %v1008 = vadd.f32 %v1004, %v1007
  %vm1009 = vweird.f32 %v702
  %vm1010 = vweird.f32 %v1004
  %vm1011 = vmor %vm1009, %vm1010
  %v1012 = vsel %vm1011, %v1004, %v1008
  %v1013 = vand.u32 2147483647, %v702
  %vm1014 = vcmp.eq.f32.partialorder %v1013, 8.507059e+37
  %v1015 = vand.u32 %v702, 2147483648
  %v1016 = vor.u32 1.1754944e-38, %v1015
  %v1017 = vsel %vm1014, %v1016, %v1012
  %v1018 = vmul.f32 1.0, %v1017
  %v1019 = vrcp.pop %v703
  %v1020 = vmul.f32 %v703, %v1019
  %v1021 = vsub.f32 1.0, %v1020
  %v1022 = vmul.f32 %v1019, %v1021
  %v1023 = vadd.f32 %v1019, %v1022
  %vm1024 = vweird.f32 %v703
  %vm1025 = vweird.f32 %v1019
  %vm1026 = vmor %vm1024, %vm1025
  %v1027 = vsel %vm1026, %v1019, %v1023
  %v1028 = vand.u32 2147483647, %v703
  %vm1029 = vcmp.eq.f32.partialorder %v1028, 8.507059e+37
  %v1030 = vand.u32 %v703, 2147483648
  %v1031 = vor.u32 1.1754944e-38, %v1030
  %v1032 = vsel %vm1029, %v1031, %v1027
  %v1033 = vmul.f32 1.0, %v1032
  %v1034 = vrcp.pop %v704
  %v1035 = vmul.f32 %v704, %v1034
  %v1036 = vsub.f32 1.0, %v1035
  %v1037 = vmul.f32 %v1034, %v1036
  %v1038 = vadd.f32 %v1034, %v1037
  %vm1039 = vweird.f32 %v704
  %vm1040 = vweird.f32 %v1034
  %vm1041 = vmor %vm1039, %vm1040
  %v1042 = vsel %vm1041, %v1034, %v1038
  %v1043 = vand.u32 2147483647, %v704
  %vm1044 = vcmp.eq.f32.partialorder %v1043, 8.507059e+37
  %v1045 = vand.u32 %v704, 2147483648
  %v1046 = vor.u32 1.1754944e-38, %v1045
  %v1047 = vsel %vm1044, %v1046, %v1042
  %v1048 = vmul.f32 1.0, %v1047
  %v1049 = vrcp.pop %v705
  %v1050 = vmul.f32 %v705, %v1049
  %v1051 = vsub.f32 1.0, %v1050
  %v1052 = vmul.f32 %v1049, %v1051
  %v1053 = vadd.f32 %v1049, %v1052
  %vm1054 = vweird.f32 %v705
  %vm1055 = vweird.f32 %v1049
  %vm1056 = vmor %vm1054, %vm1055
  %v1057 = vsel %vm1056, %v1049, %v1053
  %v1058 = vand.u32 2147483647, %v705
  %vm1059 = vcmp.eq.f32.partialorder %v1058, 8.507059e+37
  %v1060 = vand.u32 %v705, 2147483648
  %v1061 = vor.u32 1.1754944e-38, %v1060
  %v1062 = vsel %vm1059, %v1061, %v1057
  %v1063 = vmul.f32 1.0, %v1062
  %v1064 = vrcp.pop %v706
  %v1065 = vmul.f32 %v706, %v1064
  %v1066 = vsub.f32 1.0, %v1065
  %v1067 = vmul.f32 %v1064, %v1066
  %v1068 = vadd.f32 %v1064, %v1067
  %vm1069 = vweird.f32 %v706
  %vm1070 = vweird.f32 %v1064
  %vm1071 = vmor %vm1069, %vm1070
  %v1072 = vsel %vm1071, %v1064, %v1068
  %v1073 = vand.u32 2147483647, %v706
  %vm1074 = vcmp.eq.f32.partialorder %v1073, 8.507059e+37
  %v1075 = vand.u32 %v706, 2147483648
  %v1076 = vor.u32 1.1754944e-38, %v1075
  %v1077 = vsel %vm1074, %v1076, %v1072
  %v1078 = vmul.f32 1.0, %v1077
  %v1079 = vrcp.pop %v707
  %v1080 = vmul.f32 %v707, %v1079
  %v1081 = vsub.f32 1.0, %v1080
  %v1082 = vmul.f32 %v1079, %v1081
  %v1083 = vadd.f32 %v1079, %v1082
  %vm1084 = vweird.f32 %v707
  %vm1085 = vweird.f32 %v1079
  %vm1086 = vmor %vm1084, %vm1085
  %v1087 = vsel %vm1086, %v1079, %v1083
  %v1088 = vand.u32 2147483647, %v707
  %vm1089 = vcmp.eq.f32.partialorder %v1088, 8.507059e+37
  %v1090 = vand.u32 %v707, 2147483648
  %v1091 = vor.u32 1.1754944e-38, %v1090
  %v1092 = vsel %vm1089, %v1091, %v1087
  %v1093 = vmul.f32 1.0, %v1092
  %v1094 = vrcp.pop %v708
  %v1095 = vmul.f32 %v708, %v1094
  %v1096 = vsub.f32 1.0, %v1095
  %v1097 = vmul.f32 %v1094, %v1096
  %v1098 = vadd.f32 %v1094, %v1097
  %vm1099 = vweird.f32 %v708
  %vm1100 = vweird.f32 %v1094
  %vm1101 = vmor %vm1099, %vm1100
  %v1102 = vsel %vm1101, %v1094, %v1098
  %v1103 = vand.u32 2147483647, %v708
  %vm1104 = vcmp.eq.f32.partialorder %v1103, 8.507059e+37
  %v1105 = vand.u32 %v708, 2147483648
  %v1106 = vor.u32 1.1754944e-38, %v1105
  %v1107 = vsel %vm1104, %v1106, %v1102
  %v1108 = vmul.f32 1.0, %v1107
  %v1109 = vrcp.pop %v709
  %v1110 = vmul.f32 %v709, %v1109
  %v1111 = vsub.f32 1.0, %v1110
  %v1112 = vmul.f32 %v1109, %v1111
  %v1113 = vadd.f32 %v1109, %v1112
  %vm1114 = vweird.f32 %v709
  %vm1115 = vweird.f32 %v1109
  %vm1116 = vmor %vm1114, %vm1115
  %v1117 = vsel %vm1116, %v1109, %v1113
  %v1118 = vand.u32 2147483647, %v709
  %vm1119 = vcmp.eq.f32.partialorder %v1118, 8.507059e+37
  %v1120 = vand.u32 %v709, 2147483648
  %v1121 = vor.u32 1.1754944e-38, %v1120
  %v1122 = vsel %vm1119, %v1121, %v1117
  %v1123 = vmul.f32 1.0, %v1122
  %v1124 = vrcp.pop %v710
  %v1125 = vmul.f32 %v710, %v1124
  %v1126 = vsub.f32 1.0, %v1125
  %v1127 = vmul.f32 %v1124, %v1126
  %v1128 = vadd.f32 %v1124, %v1127
  %vm1129 = vweird.f32 %v710
  %vm1130 = vweird.f32 %v1124
  %vm1131 = vmor %vm1129, %vm1130
  %v1132 = vsel %vm1131, %v1124, %v1128
  %v1133 = vand.u32 2147483647, %v710
  %vm1134 = vcmp.eq.f32.partialorder %v1133, 8.507059e+37
  %v1135 = vand.u32 %v710, 2147483648
  %v1136 = vor.u32 1.1754944e-38, %v1135
  %v1137 = vsel %vm1134, %v1136, %v1132
  %v1138 = vmul.f32 1.0, %v1137
  %v1139 = vrcp.pop %v711
  %v1140 = vmul.f32 %v711, %v1139
  %v1141 = vsub.f32 1.0, %v1140
  %v1142 = vmul.f32 %v1139, %v1141
  %v1143 = vadd.f32 %v1139, %v1142
  %vm1144 = vweird.f32 %v711
  %vm1145 = vweird.f32 %v1139
  %vm1146 = vmor %vm1144, %vm1145
  %v1147 = vsel %vm1146, %v1139, %v1143
  %v1148 = vand.u32 2147483647, %v711
  %vm1149 = vcmp.eq.f32.partialorder %v1148, 8.507059e+37
  %v1150 = vand.u32 %v711, 2147483648
  %v1151 = vor.u32 1.1754944e-38, %v1150
  %v1152 = vsel %vm1149, %v1151, %v1147
  %v1153 = vmul.f32 1.0, %v1152
  %v1154 = vrcp.pop %v712
  %v1155 = vmul.f32 %v712, %v1154
  %v1156 = vsub.f32 1.0, %v1155
  %v1157 = vmul.f32 %v1154, %v1156
  %v1158 = vadd.f32 %v1154, %v1157
  %vm1159 = vweird.f32 %v712
  %vm1160 = vweird.f32 %v1154
  %vm1161 = vmor %vm1159, %vm1160
  %v1162 = vsel %vm1161, %v1154, %v1158
  %v1163 = vand.u32 2147483647, %v712
  %vm1164 = vcmp.eq.f32.partialorder %v1163, 8.507059e+37
  %v1165 = vand.u32 %v712, 2147483648
  %v1166 = vor.u32 1.1754944e-38, %v1165
  %v1167 = vsel %vm1164, %v1166, %v1162
  %v1168 = vmul.f32 1.0, %v1167
  %v1169 = vrcp.pop %v713
  %v1170 = vmul.f32 %v713, %v1169
  %v1171 = vsub.f32 1.0, %v1170
  %v1172 = vmul.f32 %v1169, %v1171
  %v1173 = vadd.f32 %v1169, %v1172
  %vm1174 = vweird.f32 %v713
  %vm1175 = vweird.f32 %v1169
  %vm1176 = vmor %vm1174, %vm1175
  %v1177 = vsel %vm1176, %v1169, %v1173
  %v1178 = vand.u32 2147483647, %v713
  %vm1179 = vcmp.eq.f32.partialorder %v1178, 8.507059e+37
  %v1180 = vand.u32 %v713, 2147483648
  %v1181 = vor.u32 1.1754944e-38, %v1180
  %v1182 = vsel %vm1179, %v1181, %v1177
  %v1183 = vmul.f32 1.0, %v1182
  %v1184 = vrcp.pop %v714
  %v1185 = vmul.f32 %v714, %v1184
  %v1186 = vsub.f32 1.0, %v1185
  %v1187 = vmul.f32 %v1184, %v1186
  %v1188 = vadd.f32 %v1184, %v1187
  %vm1189 = vweird.f32 %v714
  %vm1190 = vweird.f32 %v1184
  %vm1191 = vmor %vm1189, %vm1190
  %v1192 = vsel %vm1191, %v1184, %v1188
  %v1193 = vand.u32 2147483647, %v714
  %vm1194 = vcmp.eq.f32.partialorder %v1193, 8.507059e+37
  %v1195 = vand.u32 %v714, 2147483648
  %v1196 = vor.u32 1.1754944e-38, %v1195
  %v1197 = vsel %vm1194, %v1196, %v1192
  %v1198 = vmul.f32 1.0, %v1197
  %v1199 = vrcp.pop %v715
  %v1200 = vmul.f32 %v715, %v1199
  %v1201 = vsub.f32 1.0, %v1200
  %v1202 = vmul.f32 %v1199, %v1201
  %v1203 = vadd.f32 %v1199, %v1202
  %vm1204 = vweird.f32 %v715
  %vm1205 = vweird.f32 %v1199
  %vm1206 = vmor %vm1204, %vm1205
  %v1207 = vsel %vm1206, %v1199, %v1203
  %v1208 = vand.u32 2147483647, %v715
  %vm1209 = vcmp.eq.f32.partialorder %v1208, 8.507059e+37
  %v1210 = vand.u32 %v715, 2147483648
  %v1211 = vor.u32 1.1754944e-38, %v1210
  %v1212 = vsel %vm1209, %v1211, %v1207
  %v1213 = vmul.f32 1.0, %v1212
  %v1214 = vrcp.pop %v716
  %v1215 = vmul.f32 %v716, %v1214
  %v1216 = vsub.f32 1.0, %v1215
  %v1217 = vmul.f32 %v1214, %v1216
  %v1218 = vadd.f32 %v1214, %v1217
  %vm1219 = vweird.f32 %v716
  %vm1220 = vweird.f32 %v1214
  %vm1221 = vmor %vm1219, %vm1220
  %v1222 = vsel %vm1221, %v1214, %v1218
  %v1223 = vand.u32 2147483647, %v716
  %vm1224 = vcmp.eq.f32.partialorder %v1223, 8.507059e+37
  %v1225 = vand.u32 %v716, 2147483648
  %v1226 = vor.u32 1.1754944e-38, %v1225
  %v1227 = vsel %vm1224, %v1226, %v1222
  %v1228 = vmul.f32 1.0, %v1227
  %v1229 = vrcp.pop %v717
  %v1230 = vmul.f32 %v717, %v1229
  %v1231 = vsub.f32 1.0, %v1230
  %v1232 = vmul.f32 %v1229, %v1231
  %v1233 = vadd.f32 %v1229, %v1232
  %vm1234 = vweird.f32 %v717
  %vm1235 = vweird.f32 %v1229
  %vm1236 = vmor %vm1234, %vm1235
  %v1237 = vsel %vm1236, %v1229, %v1233
  %v1238 = vand.u32 2147483647, %v717
  %vm1239 = vcmp.eq.f32.partialorder %v1238, 8.507059e+37
  %v1240 = vand.u32 %v717, 2147483648
  %v1241 = vor.u32 1.1754944e-38, %v1240
  %v1242 = vsel %vm1239, %v1241, %v1237
  %v1243 = vmul.f32 1.0, %v1242
  %v1244 = vrcp.pop %v718
  %v1245 = vmul.f32 %v718, %v1244
  %v1246 = vsub.f32 1.0, %v1245
  %v1247 = vmul.f32 %v1244, %v1246
  %v1248 = vadd.f32 %v1244, %v1247
  %vm1249 = vweird.f32 %v718
  %vm1250 = vweird.f32 %v1244
  %vm1251 = vmor %vm1249, %vm1250
  %v1252 = vsel %vm1251, %v1244, %v1248
  %v1253 = vand.u32 2147483647, %v718
  %vm1254 = vcmp.eq.f32.partialorder %v1253, 8.507059e+37
  %v1255 = vand.u32 %v718, 2147483648
  %v1256 = vor.u32 1.1754944e-38, %v1255
  %v1257 = vsel %vm1254, %v1256, %v1252
  %v1258 = vmul.f32 1.0, %v1257
  %v1259 = vrcp.pop %v719
  %v1260 = vmul.f32 %v719, %v1259
  %v1261 = vsub.f32 1.0, %v1260
  %v1262 = vmul.f32 %v1259, %v1261
  %v1263 = vadd.f32 %v1259, %v1262
  %vm1264 = vweird.f32 %v719
  %vm1265 = vweird.f32 %v1259
  %vm1266 = vmor %vm1264, %vm1265
  %v1267 = vsel %vm1266, %v1259, %v1263
  %v1268 = vand.u32 2147483647, %v719
  %vm1269 = vcmp.eq.f32.partialorder %v1268, 8.507059e+37
  %v1270 = vand.u32 %v719, 2147483648
  %v1271 = vor.u32 1.1754944e-38, %v1270
  %v1272 = vsel %vm1269, %v1271, %v1267
  %v1273 = vmul.f32 1.0, %v1272
  %v1274 = vrcp.pop %v720
  %v1275 = vmul.f32 %v720, %v1274
  %v1276 = vsub.f32 1.0, %v1275
  %v1277 = vmul.f32 %v1274, %v1276
  %v1278 = vadd.f32 %v1274, %v1277
  %vm1279 = vweird.f32 %v720
  %vm1280 = vweird.f32 %v1274
  %vm1281 = vmor %vm1279, %vm1280
  %v1282 = vsel %vm1281, %v1274, %v1278
  %v1283 = vand.u32 2147483647, %v720
  %vm1284 = vcmp.eq.f32.partialorder %v1283, 8.507059e+37
  %v1285 = vand.u32 %v720, 2147483648
  %v1286 = vor.u32 1.1754944e-38, %v1285
  %v1287 = vsel %vm1284, %v1286, %v1282
  %v1288 = vmul.f32 1.0, %v1287
  %v1289 = vrcp.pop %v721
  %v1290 = vmul.f32 %v721, %v1289
  %v1291 = vsub.f32 1.0, %v1290
  %v1292 = vmul.f32 %v1289, %v1291
  %v1293 = vadd.f32 %v1289, %v1292
  %vm1294 = vweird.f32 %v721
  %vm1295 = vweird.f32 %v1289
  %vm1296 = vmor %vm1294, %vm1295
  %v1297 = vsel %vm1296, %v1289, %v1293
  %v1298 = vand.u32 2147483647, %v721
  %vm1299 = vcmp.eq.f32.partialorder %v1298, 8.507059e+37
  %v1300 = vand.u32 %v721, 2147483648
  %v1301 = vor.u32 1.1754944e-38, %v1300
  %v1302 = vsel %vm1299, %v1301, %v1297
  %v1303 = vmul.f32 1.0, %v1302
  %v1304 = vrcp.pop %v722
  %v1305 = vmul.f32 %v722, %v1304
  %v1306 = vsub.f32 1.0, %v1305
  %v1307 = vmul.f32 %v1304, %v1306
  %v1308 = vadd.f32 %v1304, %v1307
  %vm1309 = vweird.f32 %v722
  %vm1310 = vweird.f32 %v1304
  %vm1311 = vmor %vm1309, %vm1310
  %v1312 = vsel %vm1311, %v1304, %v1308
  %v1313 = vand.u32 2147483647, %v722
  %vm1314 = vcmp.eq.f32.partialorder %v1313, 8.507059e+37
  %v1315 = vand.u32 %v722, 2147483648
  %v1316 = vor.u32 1.1754944e-38, %v1315
  %v1317 = vsel %vm1314, %v1316, %v1312
  %v1318 = vmul.f32 1.0, %v1317
  %v1319 = vrcp.pop %v723
  %v1320 = vmul.f32 %v723, %v1319
  %v1321 = vsub.f32 1.0, %v1320
  %v1322 = vmul.f32 %v1319, %v1321
  %v1323 = vadd.f32 %v1319, %v1322
  %vm1324 = vweird.f32 %v723
  %vm1325 = vweird.f32 %v1319
  %vm1326 = vmor %vm1324, %vm1325
  %v1327 = vsel %vm1326, %v1319, %v1323
  %v1328 = vand.u32 2147483647, %v723
  %vm1329 = vcmp.eq.f32.partialorder %v1328, 8.507059e+37
  %v1330 = vand.u32 %v723, 2147483648
  %v1331 = vor.u32 1.1754944e-38, %v1330
  %v1332 = vsel %vm1329, %v1331, %v1327
  %v1333 = vmul.f32 1.0, %v1332
  %v1334 = vrcp.pop %v724
  %v1335 = vmul.f32 %v724, %v1334
  %v1336 = vsub.f32 1.0, %v1335
  %v1337 = vmul.f32 %v1334, %v1336
  %v1338 = vadd.f32 %v1334, %v1337
  %vm1339 = vweird.f32 %v724
  %vm1340 = vweird.f32 %v1334
  %vm1341 = vmor %vm1339, %vm1340
  %v1342 = vsel %vm1341, %v1334, %v1338
  %v1343 = vand.u32 2147483647, %v724
  %vm1344 = vcmp.eq.f32.partialorder %v1343, 8.507059e+37
  %v1345 = vand.u32 %v724, 2147483648
  %v1346 = vor.u32 1.1754944e-38, %v1345
  %v1347 = vsel %vm1344, %v1346, %v1342
  %v1348 = vmul.f32 1.0, %v1347
  %v1349 = vrcp.pop %v725
  %v1350 = vmul.f32 %v725, %v1349
  %v1351 = vsub.f32 1.0, %v1350
  %v1352 = vmul.f32 %v1349, %v1351
  %v1353 = vadd.f32 %v1349, %v1352
  %vm1354 = vweird.f32 %v725
  %vm1355 = vweird.f32 %v1349
  %vm1356 = vmor %vm1354, %vm1355
  %v1357 = vsel %vm1356, %v1349, %v1353
  %v1358 = vand.u32 2147483647, %v725
  %vm1359 = vcmp.eq.f32.partialorder %v1358, 8.507059e+37
  %v1360 = vand.u32 %v725, 2147483648
  %v1361 = vor.u32 1.1754944e-38, %v1360
  %v1362 = vsel %vm1359, %v1361, %v1357
  %v1363 = vmul.f32 1.0, %v1362
  %v1364 = vrcp.pop %v726
  %v1365 = vmul.f32 %v726, %v1364
  %v1366 = vsub.f32 1.0, %v1365
  %v1367 = vmul.f32 %v1364, %v1366
  %v1368 = vadd.f32 %v1364, %v1367
  %vm1369 = vweird.f32 %v726
  %vm1370 = vweird.f32 %v1364
  %vm1371 = vmor %vm1369, %vm1370
  %v1372 = vsel %vm1371, %v1364, %v1368
  %v1373 = vand.u32 2147483647, %v726
  %vm1374 = vcmp.eq.f32.partialorder %v1373, 8.507059e+37
  %v1375 = vand.u32 %v726, 2147483648
  %v1376 = vor.u32 1.1754944e-38, %v1375
  %v1377 = vsel %vm1374, %v1376, %v1372
  %v1378 = vmul.f32 1.0, %v1377
  %v1379 = vrcp.pop %v727
  %v1380 = vmul.f32 %v727, %v1379
  %v1381 = vsub.f32 1.0, %v1380
  %v1382 = vmul.f32 %v1379, %v1381
  %v1383 = vadd.f32 %v1379, %v1382
  %vm1384 = vweird.f32 %v727
  %vm1385 = vweird.f32 %v1379
  %vm1386 = vmor %vm1384, %vm1385
  %v1387 = vsel %vm1386, %v1379, %v1383
  %v1388 = vand.u32 2147483647, %v727
  %vm1389 = vcmp.eq.f32.partialorder %v1388, 8.507059e+37
  %v1390 = vand.u32 %v727, 2147483648
  %v1391 = vor.u32 1.1754944e-38, %v1390
  %v1392 = vsel %vm1389, %v1391, %v1387
  %v1393 = vmul.f32 1.0, %v1392
  %v1394 = vrcp.pop %v728
  %v1395 = vmul.f32 %v728, %v1394
  %v1396 = vsub.f32 1.0, %v1395
  %v1397 = vmul.f32 %v1394, %v1396
  %v1398 = vadd.f32 %v1394, %v1397
  %vm1399 = vweird.f32 %v728
  %vm1400 = vweird.f32 %v1394
  %vm1401 = vmor %vm1399, %vm1400
  %v1402 = vsel %vm1401, %v1394, %v1398
  %v1403 = vand.u32 2147483647, %v728
  %vm1404 = vcmp.eq.f32.partialorder %v1403, 8.507059e+37
  %v1405 = vand.u32 %v728, 2147483648
  %v1406 = vor.u32 1.1754944e-38, %v1405
  %v1407 = vsel %vm1404, %v1406, %v1402
  %v1408 = vmul.f32 1.0, %v1407
  %v1409 = vrcp.pop %v729
  %v1410 = vmul.f32 %v729, %v1409
  %v1411 = vsub.f32 1.0, %v1410
  %v1412 = vmul.f32 %v1409, %v1411
  %v1413 = vadd.f32 %v1409, %v1412
  %vm1414 = vweird.f32 %v729
  %vm1415 = vweird.f32 %v1409
  %vm1416 = vmor %vm1414, %vm1415
  %v1417 = vsel %vm1416, %v1409, %v1413
  %v1418 = vand.u32 2147483647, %v729
  %vm1419 = vcmp.eq.f32.partialorder %v1418, 8.507059e+37
  %v1420 = vand.u32 %v729, 2147483648
  %v1421 = vor.u32 1.1754944e-38, %v1420
  %v1422 = vsel %vm1419, %v1421, %v1417
  %v1423 = vmul.f32 1.0, %v1422
  %v1424 = vrcp.pop %v730
  %v1425 = vmul.f32 %v730, %v1424
  %v1426 = vsub.f32 1.0, %v1425
  %v1427 = vmul.f32 %v1424, %v1426
  %v1428 = vadd.f32 %v1424, %v1427
  %vm1429 = vweird.f32 %v730
  %vm1430 = vweird.f32 %v1424
  %vm1431 = vmor %vm1429, %vm1430
  %v1432 = vsel %vm1431, %v1424, %v1428
  %v1433 = vand.u32 2147483647, %v730
  %vm1434 = vcmp.eq.f32.partialorder %v1433, 8.507059e+37
  %v1435 = vand.u32 %v730, 2147483648
  %v1436 = vor.u32 1.1754944e-38, %v1435
  %v1437 = vsel %vm1434, %v1436, %v1432
  %v1438 = vmul.f32 1.0, %v1437
  %v1439 = vrcp.pop %v731
  %v1440 = vmul.f32 %v731, %v1439
  %v1441 = vsub.f32 1.0, %v1440
  %v1442 = vmul.f32 %v1439, %v1441
  %v1443 = vadd.f32 %v1439, %v1442
  %vm1444 = vweird.f32 %v731
  %vm1445 = vweird.f32 %v1439
  %vm1446 = vmor %vm1444, %vm1445
  %v1447 = vsel %vm1446, %v1439, %v1443
  %v1448 = vand.u32 2147483647, %v731
  %vm1449 = vcmp.eq.f32.partialorder %v1448, 8.507059e+37
  %v1450 = vand.u32 %v731, 2147483648
  %v1451 = vor.u32 1.1754944e-38, %v1450
  %v1452 = vsel %vm1449, %v1451, %v1447
  %v1453 = vmul.f32 1.0, %v1452
  %v1454 = vrcp.pop %v732
  %v1455 = vmul.f32 %v732, %v1454
  %v1456 = vsub.f32 1.0, %v1455
  %v1457 = vmul.f32 %v1454, %v1456
  %v1458 = vadd.f32 %v1454, %v1457
  %vm1459 = vweird.f32 %v732
  %vm1460 = vweird.f32 %v1454
  %vm1461 = vmor %vm1459, %vm1460
  %v1462 = vsel %vm1461, %v1454, %v1458
  %v1463 = vand.u32 2147483647, %v732
  %vm1464 = vcmp.eq.f32.partialorder %v1463, 8.507059e+37
  %v1465 = vand.u32 %v732, 2147483648
  %v1466 = vor.u32 1.1754944e-38, %v1465
  %v1467 = vsel %vm1464, %v1466, %v1462
  %v1468 = vmul.f32 1.0, %v1467
  %v1469 = vrcp.pop %v733
  %v1470 = vmul.f32 %v733, %v1469
  %v1471 = vsub.f32 1.0, %v1470
  %v1472 = vmul.f32 %v1469, %v1471
  %v1473 = vadd.f32 %v1469, %v1472
  %vm1474 = vweird.f32 %v733
  %vm1475 = vweird.f32 %v1469
  %vm1476 = vmor %vm1474, %vm1475
  %v1477 = vsel %vm1476, %v1469, %v1473
  %v1478 = vand.u32 2147483647, %v733
  %vm1479 = vcmp.eq.f32.partialorder %v1478, 8.507059e+37
  %v1480 = vand.u32 %v733, 2147483648
  %v1481 = vor.u32 1.1754944e-38, %v1480
  %v1482 = vsel %vm1479, %v1481, %v1477
  %v1483 = vmul.f32 1.0, %v1482
  %v1484 = vrcp.pop %v734
  %v1485 = vmul.f32 %v734, %v1484
  %v1486 = vsub.f32 1.0, %v1485
  %v1487 = vmul.f32 %v1484, %v1486
  %v1488 = vadd.f32 %v1484, %v1487
  %vm1489 = vweird.f32 %v734
  %vm1490 = vweird.f32 %v1484
  %vm1491 = vmor %vm1489, %vm1490
  %v1492 = vsel %vm1491, %v1484, %v1488
  %v1493 = vand.u32 2147483647, %v734
  %vm1494 = vcmp.eq.f32.partialorder %v1493, 8.507059e+37
  %v1495 = vand.u32 %v734, 2147483648
  %v1496 = vor.u32 1.1754944e-38, %v1495
  %v1497 = vsel %vm1494, %v1496, %v1492
  %v1498 = vmul.f32 1.0, %v1497
  %v1499 = vrcp.pop %v735
  %v1500 = vmul.f32 %v735, %v1499
  %v1501 = vsub.f32 1.0, %v1500
  %v1502 = vmul.f32 %v1499, %v1501
  %v1503 = vadd.f32 %v1499, %v1502
  %vm1504 = vweird.f32 %v735
  %vm1505 = vweird.f32 %v1499
  %vm1506 = vmor %vm1504, %vm1505
  %v1507 = vsel %vm1506, %v1499, %v1503
  %v1508 = vand.u32 2147483647, %v735
  %vm1509 = vcmp.eq.f32.partialorder %v1508, 8.507059e+37
  %v1510 = vand.u32 %v735, 2147483648
  %v1511 = vor.u32 1.1754944e-38, %v1510
  %v1512 = vsel %vm1509, %v1511, %v1507
  %v1513 = vmul.f32 1.0, %v1512
  %v1514 = vrcp.pop %v736
  %v1515 = vmul.f32 %v736, %v1514
  %v1516 = vsub.f32 1.0, %v1515
  %v1517 = vmul.f32 %v1514, %v1516
  %v1518 = vadd.f32 %v1514, %v1517
  %vm1519 = vweird.f32 %v736
  %vm1520 = vweird.f32 %v1514
  %vm1521 = vmor %vm1519, %vm1520
  %v1522 = vsel %vm1521, %v1514, %v1518
  %v1523 = vand.u32 2147483647, %v736
  %vm1524 = vcmp.eq.f32.partialorder %v1523, 8.507059e+37
  %v1525 = vand.u32 %v736, 2147483648
  %v1526 = vor.u32 1.1754944e-38, %v1525
  %v1527 = vsel %vm1524, %v1526, %v1522
  %v1528 = vmul.f32 1.0, %v1527
  %v1529 = vrcp.pop %v737
  %v1530 = vmul.f32 %v737, %v1529
  %v1531 = vsub.f32 1.0, %v1530
  %v1532 = vmul.f32 %v1529, %v1531
  %v1533 = vadd.f32 %v1529, %v1532
  %vm1534 = vweird.f32 %v737
  %vm1535 = vweird.f32 %v1529
  %vm1536 = vmor %vm1534, %vm1535
  %v1537 = vsel %vm1536, %v1529, %v1533
  %v1538 = vand.u32 2147483647, %v737
  %vm1539 = vcmp.eq.f32.partialorder %v1538, 8.507059e+37
  %v1540 = vand.u32 %v737, 2147483648
  %v1541 = vor.u32 1.1754944e-38, %v1540
  %v1542 = vsel %vm1539, %v1541, %v1537
  %v1543 = vmul.f32 1.0, %v1542
  %v1544 = vrcp.pop %v738
  %v1545 = vmul.f32 %v738, %v1544
  %v1546 = vsub.f32 1.0, %v1545
  %v1547 = vmul.f32 %v1544, %v1546
  %v1548 = vadd.f32 %v1544, %v1547
  %vm1549 = vweird.f32 %v738
  %vm1550 = vweird.f32 %v1544
  %vm1551 = vmor %vm1549, %vm1550
  %v1552 = vsel %vm1551, %v1544, %v1548
  %v1553 = vand.u32 2147483647, %v738
  %vm1554 = vcmp.eq.f32.partialorder %v1553, 8.507059e+37
  %v1555 = vand.u32 %v738, 2147483648
  %v1556 = vor.u32 1.1754944e-38, %v1555
  %v1557 = vsel %vm1554, %v1556, %v1552
  %v1558 = vmul.f32 1.0, %v1557
  %v1559 = vrcp.pop %v739
  %v1560 = vmul.f32 %v739, %v1559
  %v1561 = vsub.f32 1.0, %v1560
  %v1562 = vmul.f32 %v1559, %v1561
  %v1563 = vadd.f32 %v1559, %v1562
  %vm1564 = vweird.f32 %v739
  %vm1565 = vweird.f32 %v1559
  %vm1566 = vmor %vm1564, %vm1565
  %v1567 = vsel %vm1566, %v1559, %v1563
  %v1568 = vand.u32 2147483647, %v739
  %vm1569 = vcmp.eq.f32.partialorder %v1568, 8.507059e+37
  %v1570 = vand.u32 %v739, 2147483648
  %v1571 = vor.u32 1.1754944e-38, %v1570
  %v1572 = vsel %vm1569, %v1571, %v1567
  %v1573 = vmul.f32 1.0, %v1572
  %v1574 = vrcp.pop %v740
  %v1575 = vmul.f32 %v740, %v1574
  %v1576 = vsub.f32 1.0, %v1575
  %v1577 = vmul.f32 %v1574, %v1576
  %v1578 = vadd.f32 %v1574, %v1577
  %vm1579 = vweird.f32 %v740
  %vm1580 = vweird.f32 %v1574
  %vm1581 = vmor %vm1579, %vm1580
  %v1582 = vsel %vm1581, %v1574, %v1578
  %v1583 = vand.u32 2147483647, %v740
  %vm1584 = vcmp.eq.f32.partialorder %v1583, 8.507059e+37
  %v1585 = vand.u32 %v740, 2147483648
  %v1586 = vor.u32 1.1754944e-38, %v1585
  %v1587 = vsel %vm1584, %v1586, %v1582
  %v1588 = vmul.f32 1.0, %v1587
  %v1589 = vrcp.pop %v741
  %v1590 = vmul.f32 %v741, %v1589
  %v1591 = vsub.f32 1.0, %v1590
  %v1592 = vmul.f32 %v1589, %v1591
  %v1593 = vadd.f32 %v1589, %v1592
  %vm1594 = vweird.f32 %v741
  %vm1595 = vweird.f32 %v1589
  %vm1596 = vmor %vm1594, %vm1595
  %v1597 = vsel %vm1596, %v1589, %v1593
  %v1598 = vand.u32 2147483647, %v741
  %vm1599 = vcmp.eq.f32.partialorder %v1598, 8.507059e+37
  %v1600 = vand.u32 %v741, 2147483648
  %v1601 = vor.u32 1.1754944e-38, %v1600
  %v1602 = vsel %vm1599, %v1601, %v1597
  %v1603 = vmul.f32 1.0, %v1602
  %v1604 = vrcp.pop %v742
  %v1605 = vmul.f32 %v742, %v1604
  %v1606 = vsub.f32 1.0, %v1605
  %v1607 = vmul.f32 %v1604, %v1606
  %v1608 = vadd.f32 %v1604, %v1607
  %vm1609 = vweird.f32 %v742
  %vm1610 = vweird.f32 %v1604
  %vm1611 = vmor %vm1609, %vm1610
  %v1612 = vsel %vm1611, %v1604, %v1608
  %v1613 = vand.u32 2147483647, %v742
  %vm1614 = vcmp.eq.f32.partialorder %v1613, 8.507059e+37
  %v1615 = vand.u32 %v742, 2147483648
  %v1616 = vor.u32 1.1754944e-38, %v1615
  %v1617 = vsel %vm1614, %v1616, %v1612
  %v1618 = vmul.f32 1.0, %v1617
  %v1619 = vrcp.pop %v743
  %v1620 = vmul.f32 %v743, %v1619
  %v1621 = vsub.f32 1.0, %v1620
  %v1622 = vmul.f32 %v1619, %v1621
  %v1623 = vadd.f32 %v1619, %v1622
  %vm1624 = vweird.f32 %v743
  %vm1625 = vweird.f32 %v1619
  %vm1626 = vmor %vm1624, %vm1625
  %v1627 = vsel %vm1626, %v1619, %v1623
  %v1628 = vand.u32 2147483647, %v743
  %vm1629 = vcmp.eq.f32.partialorder %v1628, 8.507059e+37
  %v1630 = vand.u32 %v743, 2147483648
  %v1631 = vor.u32 1.1754944e-38, %v1630
  %v1632 = vsel %vm1629, %v1631, %v1627
  %v1633 = vmul.f32 1.0, %v1632
  %v1634 = vrcp.pop %v744
  %v1635 = vmul.f32 %v744, %v1634
  %v1636 = vsub.f32 1.0, %v1635
  %v1637 = vmul.f32 %v1634, %v1636
  %v1638 = vadd.f32 %v1634, %v1637
  %vm1639 = vweird.f32 %v744
  %vm1640 = vweird.f32 %v1634
  %vm1641 = vmor %vm1639, %vm1640
  %v1642 = vsel %vm1641, %v1634, %v1638
  %v1643 = vand.u32 2147483647, %v744
  %vm1644 = vcmp.eq.f32.partialorder %v1643, 8.507059e+37
  %v1645 = vand.u32 %v744, 2147483648
  %v1646 = vor.u32 1.1754944e-38, %v1645
  %v1647 = vsel %vm1644, %v1646, %v1642
  %v1648 = vmul.f32 1.0, %v1647
  %v1649 = vrcp.pop %v745
  %v1650 = vmul.f32 %v745, %v1649
  %v1651 = vsub.f32 1.0, %v1650
  %v1652 = vmul.f32 %v1649, %v1651
  %v1653 = vadd.f32 %v1649, %v1652
  %vm1654 = vweird.f32 %v745
  %vm1655 = vweird.f32 %v1649
  %vm1656 = vmor %vm1654, %vm1655
  %v1657 = vsel %vm1656, %v1649, %v1653
  %v1658 = vand.u32 2147483647, %v745
  %vm1659 = vcmp.eq.f32.partialorder %v1658, 8.507059e+37
  %v1660 = vand.u32 %v745, 2147483648
  %v1661 = vor.u32 1.1754944e-38, %v1660
  %v1662 = vsel %vm1659, %v1661, %v1657
  %v1663 = vmul.f32 1.0, %v1662
  %v1664 = vrcp.pop %v746
  %v1665 = vmul.f32 %v746, %v1664
  %v1666 = vsub.f32 1.0, %v1665
  %v1667 = vmul.f32 %v1664, %v1666
  %v1668 = vadd.f32 %v1664, %v1667
  %vm1669 = vweird.f32 %v746
  %vm1670 = vweird.f32 %v1664
  %vm1671 = vmor %vm1669, %vm1670
  %v1672 = vsel %vm1671, %v1664, %v1668
  %v1673 = vand.u32 2147483647, %v746
  %vm1674 = vcmp.eq.f32.partialorder %v1673, 8.507059e+37
  %v1675 = vand.u32 %v746, 2147483648
  %v1676 = vor.u32 1.1754944e-38, %v1675
  %v1677 = vsel %vm1674, %v1676, %v1672
  %v1678 = vmul.f32 1.0, %v1677
  %v1679 = vrcp.pop %v747
  %v1680 = vmul.f32 %v747, %v1679
  %v1681 = vsub.f32 1.0, %v1680
  %v1682 = vmul.f32 %v1679, %v1681
  %v1683 = vadd.f32 %v1679, %v1682
  %vm1684 = vweird.f32 %v747
  %vm1685 = vweird.f32 %v1679
  %vm1686 = vmor %vm1684, %vm1685
  %v1687 = vsel %vm1686, %v1679, %v1683
  %v1688 = vand.u32 2147483647, %v747
  %vm1689 = vcmp.eq.f32.partialorder %v1688, 8.507059e+37
  %v1690 = vand.u32 %v747, 2147483648
  %v1691 = vor.u32 1.1754944e-38, %v1690
  %v1692 = vsel %vm1689, %v1691, %v1687
  %v1693 = vmul.f32 1.0, %v1692
  %v1694 = vrcp.pop %v748
  %v1695 = vmul.f32 %v748, %v1694
  %v1696 = vsub.f32 1.0, %v1695
  %v1697 = vmul.f32 %v1694, %v1696
  %v1698 = vadd.f32 %v1694, %v1697
  %vm1699 = vweird.f32 %v748
  %vm1700 = vweird.f32 %v1694
  %vm1701 = vmor %vm1699, %vm1700
  %v1702 = vsel %vm1701, %v1694, %v1698
  %v1703 = vand.u32 2147483647, %v748
  %vm1704 = vcmp.eq.f32.partialorder %v1703, 8.507059e+37
  %v1705 = vand.u32 %v748, 2147483648
  %v1706 = vor.u32 1.1754944e-38, %v1705
  %v1707 = vsel %vm1704, %v1706, %v1702
  %v1708 = vmul.f32 1.0, %v1707
  %1709 = vst [vmem:[%s3] sm:$0xff] %v763
  %1710 = vst [vmem:[%s3 + $0x8] sm:$0xff] %v778
  %1711 = vst [vmem:[%s3 + $0x10] sm:$0xff] %v793
  %1712 = vst [vmem:[%s3 + $0x18] sm:$0xff] %v808
  %1713 = vst [vmem:[%s3 + $0x20] sm:$0xff] %v823
  %1714 = vst [vmem:[%s3 + $0x28] sm:$0xff] %v838
  %1715 = vst [vmem:[%s3 + $0x30] sm:$0xff] %v853
  %1716 = vst [vmem:[%s3 + $0x38] sm:$0xff] %v868
  %1717 = vst [vmem:[%s3 + $0x40] sm:$0xff] %v883
  %1718 = vst [vmem:[%s3 + $0x48] sm:$0xff] %v898
  %1719 = vst [vmem:[%s3 + $0x50] sm:$0xff] %v913
  %1720 = vst [vmem:[%s3 + $0x58] sm:$0xff] %v928
  %1721 = vst [vmem:[%s3 + $0x60] sm:$0xff] %v943
  %1722 = vst [vmem:[%s3 + $0x68] sm:$0xff] %v958
  %1723 = vst [vmem:[%s3 + $0x70] sm:$0xff] %v973
  %1724 = vst [vmem:[%s3 + $0x78] sm:$0xff] %v988
  %1725 = vst [vmem:[%s3 + $0x80] sm:$0xff] %v1003
  %1726 = vst [vmem:[%s3 + $0x88] sm:$0xff] %v1018
  %1727 = vst [vmem:[%s3 + $0x90] sm:$0xff] %v1033
  %1728 = vst [vmem:[%s3 + $0x98] sm:$0xff] %v1048
  %1729 = vst [vmem:[%s3 + $0xa0] sm:$0xff] %v1063
  %1730 = vst [vmem:[%s3 + $0xa8] sm:$0xff] %v1078
  %1731 = vst [vmem:[%s3 + $0xb0] sm:$0xff] %v1093
  %1732 = vst [vmem:[%s3 + $0xb8] sm:$0xff] %v1108
  %1733 = vst [vmem:[%s3 + $0xc0] sm:$0xff] %v1123
  %1734 = vst [vmem:[%s3 + $0xc8] sm:$0xff] %v1138
  %1735 = vst [vmem:[%s3 + $0xd0] sm:$0xff] %v1153
  %1736 = vst [vmem:[%s3 + $0xd8] sm:$0xff] %v1168
  %1737 = vst [vmem:[%s3 + $0xe0] sm:$0xff] %v1183
  %1738 = vst [vmem:[%s3 + $0xe8] sm:$0xff] %v1198
  %1739 = vst [vmem:[%s3 + $0xf0] sm:$0xff] %v1213
  %1740 = vst [vmem:[%s3 + $0xf8] sm:$0xff] %v1228
  %1741 = vst [vmem:[%s3 + $0x100] sm:$0xff] %v1243
  %1742 = vst [vmem:[%s3 + $0x108] sm:$0xff] %v1258
  %1743 = vst [vmem:[%s3 + $0x110] sm:$0xff] %v1273
  %1744 = vst [vmem:[%s3 + $0x118] sm:$0xff] %v1288
  %1745 = vst [vmem:[%s3 + $0x120] sm:$0xff] %v1303
  %1746 = vst [vmem:[%s3 + $0x128] sm:$0xff] %v1318
  %1747 = vst [vmem:[%s3 + $0x130] sm:$0xff] %v1333
  %1748 = vst [vmem:[%s3 + $0x138] sm:$0xff] %v1348
  %1749 = vst [vmem:[%s3 + $0x140] sm:$0xff] %v1363
  %1750 = vst [vmem:[%s3 + $0x148] sm:$0xff] %v1378
  %1751 = vst [vmem:[%s3 + $0x150] sm:$0xff] %v1393
  %1752 = vst [vmem:[%s3 + $0x158] sm:$0xff] %v1408
  %1753 = vst [vmem:[%s3 + $0x160] sm:$0xff] %v1423
  %1754 = vst [vmem:[%s3 + $0x168] sm:$0xff] %v1438
  %1755 = vst [vmem:[%s3 + $0x170] sm:$0xff] %v1453
  %1756 = vst [vmem:[%s3 + $0x178] sm:$0xff] %v1468
  %1757 = vst [vmem:[%s3 + $0x180] sm:$0xff] %v1483
  %1758 = vst [vmem:[%s3 + $0x188] sm:$0xff] %v1498
  %1759 = vst [vmem:[%s3 + $0x190] sm:$0xff] %v1513
  %1760 = vst [vmem:[%s3 + $0x198] sm:$0xff] %v1528
  %1761 = vst [vmem:[%s3 + $0x1a0] sm:$0xff] %v1543
  %1762 = vst [vmem:[%s3 + $0x1a8] sm:$0xff] %v1558
  %1763 = vst [vmem:[%s3 + $0x1b0] sm:$0xff] %v1573
  %1764 = vst [vmem:[%s3 + $0x1b8] sm:$0xff] %v1588
  %1765 = vst [vmem:[%s3 + $0x1c0] sm:$0xff] %v1603
  %1766 = vst [vmem:[%s3 + $0x1c8] sm:$0xff] %v1618
  %1767 = vst [vmem:[%s3 + $0x1d0] sm:$0xff] %v1633
  %1768 = vst [vmem:[%s3 + $0x1d8] sm:$0xff] %v1648
  %1769 = vst [vmem:[%s3 + $0x1e0] sm:$0xff] %v1663
  %1770 = vst [vmem:[%s3 + $0x1e8] sm:$0xff] %v1678
  %1771 = vst [vmem:[%s3 + $0x1f0] sm:$0xff] %v1693
  %1772 = vst [vmem:[%s3 + $0x1f8] sm:$0xff] %v1708
  // Predicated region
  $region14: #{dae_forward.1} parent=0 // pred_check
    _
  $region15: #{dae_forward.1} parent=0 // pred_check_branch
    %1774 = sbr.rel (0) target = $region17
  $region16: #{dae_forward.1} parent=0 // pred_region
    _
  $region17: #{dae_forward.1} parent=0 // pred_fallthru
    _
  // Predicated region
  $region18: #{dae_forward.1} parent=0 // pred_check
    _
  $region19: #{dae_forward.1} parent=0 // pred_check_branch
    %1776 = sbr.rel (0) target = $region21
  $region20: #{dae_forward.1} parent=0 // pred_region
    _
  $region21: #{dae_forward.1} parent=0 // pred_fallthru
    _

</llo_original>
